<compile_context>
chip_gen: v7x
topology: tpu7x:2x2x1
jax: 0.10.0
libtpu: 0.0.40
codegen_flags: <defaults>
</compile_context>

<pallas_src>
import functools

import jax
import jax.numpy as jnp
from jax.experimental import pallas as pl
from jax.experimental.pallas import tpu as pltpu

NEG_INF = -1e9

# Tile presets (budgeted for v7x's 64 MiB physical VMEM; fine on v5e/v6e too).
DENSE_TM = 256
DENSE_TN = 256
DENSE_TK = 512
LN_ROWS = 512
ATTN_TQ = 128
ATTN_TK = 128


def _round_up(x, m):
    return ((x + m - 1) // m) * m


def _pad2d(a, rows, cols):
    return jnp.pad(a, ((0, rows - a.shape[0]), (0, cols - a.shape[1])))


# ----------------------------------------------------------------------------
# Tiled dense kernel (matmul + bias, optional fused ReLU / softmax epilogue)
# ----------------------------------------------------------------------------
def _dense_kernel(x_ref, w_ref, b_ref, o_ref, acc_ref, *, activation, n_valid):
    # Grid-index primitives hoisted to the kernel top level (never inside
    # pl.when bodies -> keeps both Mosaic and interpret lowering happy).
    j = pl.program_id(1)
    k = pl.program_id(2)
    k_last = pl.num_programs(2) - 1

    @pl.when(k == 0)
    def _():
        acc_ref[...] = jnp.zeros_like(acc_ref)

    acc_ref[...] += jnp.dot(x_ref[...], w_ref[...],
                            preferred_element_type=jnp.float32)

    @pl.when(k == k_last)
    def _():
        y = acc_ref[...] + b_ref[...]
        if activation == "relu":
            y = jnp.maximum(y, 0.0)
        elif activation == "softmax":
            # Softmax over the (single) padded N tile; zero-padded vocab
            # columns are masked out with iota so they get exactly 0 prob.
            # TODO(synk): column-tile with online max/sum for very large
            # vocabularies instead of one padded N tile.
            tn = o_ref.shape[-1]
            col = j * tn + jax.lax.broadcasted_iota(jnp.int32, y.shape, 1)
            y = jnp.where(col < n_valid, y, NEG_INF)
            y = y - jnp.max(y, axis=-1, keepdims=True)
            p = jnp.exp(y)
            y = p / jnp.sum(p, axis=-1, keepdims=True)
        o_ref[...] = y


def dense(x2d, w, b, *, activation="none"):
    """act(x @ W + b).  x:(M,K), W:(K,N), b:(N,) -> (M,N) float32."""
    M, K = x2d.shape
    N = w.shape[1]

    tm = min(DENSE_TM, _round_up(M, 8))
    tk = min(DENSE_TK, _round_up(K, 128))
    if activation == "softmax":
        tn = _round_up(N, 128)          # softmax needs the whole row per tile
    else:
        tn = min(DENSE_TN, _round_up(N, 128))

    Mp, Kp, Np = _round_up(M, tm), _round_up(K, tk), _round_up(N, tn)

    xp = _pad2d(x2d, Mp, Kp).astype(jnp.bfloat16)      # bf16 MXU inputs
    wp = _pad2d(w, Kp, Np).astype(jnp.bfloat16)
    bp = jnp.pad(b.astype(jnp.float32), (0, Np - N)).reshape(1, Np)

    out = pl.pallas_call(
        functools.partial(_dense_kernel, activation=activation, n_valid=N),
        grid=(Mp // tm, Np // tn, Kp // tk),
        in_specs=[
            pl.BlockSpec((tm, tk), lambda i, j, k: (i, k)),
            pl.BlockSpec((tk, tn), lambda i, j, k: (k, j)),
            pl.BlockSpec((1, tn), lambda i, j, k: (0, j)),
        ],
        out_specs=pl.BlockSpec((tm, tn), lambda i, j, k: (i, j)),
        out_shape=jax.ShapeDtypeStruct((Mp, Np), jnp.float32),
        scratch_shapes=[pltpu.VMEM((tm, tn), jnp.float32)],
        compiler_params=pltpu.CompilerParams(
            dimension_semantics=("parallel", "parallel", "arbitrary")),
    )(xp, wp, bp)
    return out[:M, :N]


# ----------------------------------------------------------------------------
# Fused residual-add + LayerNorm (row-tiled)
# ----------------------------------------------------------------------------
def _add_layernorm_kernel(x_ref, r_ref, g_ref, b_ref, o_ref, *, eps):
    x = x_ref[...] + r_ref[...]                       # fused residual add (f32)
    mu = jnp.mean(x, axis=-1, keepdims=True)
    var = jnp.mean((x - mu) ** 2, axis=-1, keepdims=True)
    o_ref[...] = (x - mu) * jax.lax.rsqrt(var + eps) * g_ref[...] + b_ref[...]


def add_layer_norm(x3d, res3d, gamma, beta, eps=1e-5):
    """LayerNorm(x + residual) over the last dim, tiled over rows."""
    B, L, D = x3d.shape
    M = B * L
    tr = min(LN_ROWS, _round_up(M, 8))
    Mp = _round_up(M, tr)

    x2 = jnp.pad(x3d.reshape(M, D), ((0, Mp - M), (0, 0)))
    r2 = jnp.pad(res3d.reshape(M, D), ((0, Mp - M), (0, 0)))

    out = pl.pallas_call(
        functools.partial(_add_layernorm_kernel, eps=eps),
        grid=(Mp // tr,),
        in_specs=[
            pl.BlockSpec((tr, D), lambda i: (i, 0)),
            pl.BlockSpec((tr, D), lambda i: (i, 0)),
            pl.BlockSpec((1, D), lambda i: (0, 0)),
            pl.BlockSpec((1, D), lambda i: (0, 0)),
        ],
        out_specs=pl.BlockSpec((tr, D), lambda i: (i, 0)),
        out_shape=jax.ShapeDtypeStruct((Mp, D), jnp.float32),
        compiler_params=pltpu.CompilerParams(
            dimension_semantics=("parallel",)),
    )(x2, r2, gamma.reshape(1, D), beta.reshape(1, D))
    return out[:M].reshape(B, L, D)


# ----------------------------------------------------------------------------
# Flash-style multi-head attention (online softmax, Lk-tiled, in-kernel masks)
# ----------------------------------------------------------------------------
def _flash_mha_kernel(q_ref, k_ref, v_ref, o_ref, m_sc, l_sc, acc_sc, *,
                      scale, causal, k_valid, tq, tk):
    # All grid-index primitives hoisted to the kernel top level.
    qi = pl.program_id(2)
    ki = pl.program_id(3)
    ki_last = pl.num_programs(3) - 1

    @pl.when(ki == 0)
    def _():
        m_sc[...] = jnp.full_like(m_sc, -jnp.inf)
        l_sc[...] = jnp.zeros_like(l_sc)
        acc_sc[...] = jnp.zeros_like(acc_sc)

    q = q_ref[0, 0]                                   # (tq, Dh) bf16
    k = k_ref[0, 0]                                   # (tk, Dh) bf16
    v = v_ref[0, 0]                                   # (tk, Dh) bf16

    s = jnp.dot(q, k.T, preferred_element_type=jnp.float32) * scale  # (tq, tk)

    # Masks generated on the VPU from iota (no HBM mask tensors).
    if causal or (k_valid is not None):
        row = qi * tq + jax.lax.broadcasted_iota(jnp.int32, (tq, tk), 0)
        col = ki * tk + jax.lax.broadcasted_iota(jnp.int32, (tq, tk), 1)
        if causal:
            s = s + jnp.where(col > row, NEG_INF, 0.0)
        if k_valid is not None:                       # zero-padded key columns
            s = s + jnp.where(col >= k_valid, NEG_INF, 0.0)

    m_prev = m_sc[...]
    m_new = jnp.maximum(m_prev, jnp.max(s, axis=-1, keepdims=True))
    alpha = jnp.exp(m_prev - m_new)
    p = jnp.exp(s - m_new)
    l_sc[...] = alpha * l_sc[...] + jnp.sum(p, axis=-1, keepdims=True)
    acc_sc[...] = alpha * acc_sc[...] + jnp.dot(
        p.astype(v.dtype), v, preferred_element_type=jnp.float32)
    m_sc[...] = m_new

    @pl.when(ki == ki_last)
    def _():
        o_ref[0, 0] = (acc_sc[...] / l_sc[...]).astype(o_ref.dtype)


def flash_mha(q, k, v, *, causal):
    """q:(B,H,Lq,Dh), k/v:(B,H,Lk,Dh) -> (B,H,Lq,Dh) f32."""
    B, H, Lq, Dh = q.shape
    Lk = k.shape[2]
    scale = 1.0 / float(Dh) ** 0.5

    tq = min(ATTN_TQ, _round_up(Lq, 8))
    tk = min(ATTN_TK, _round_up(Lk, 8))
    Lqp, Lkp = _round_up(Lq, tq), _round_up(Lk, tk)

    qp = jnp.pad(q, ((0, 0), (0, 0), (0, Lqp - Lq), (0, 0))).astype(jnp.bfloat16)
    kp = jnp.pad(k, ((0, 0), (0, 0), (0, Lkp - Lk), (0, 0))).astype(jnp.bfloat16)
    vp = jnp.pad(v, ((0, 0), (0, 0), (0, Lkp - Lk), (0, 0))).astype(jnp.bfloat16)
    k_valid = Lk if Lkp != Lk else None

    # TODO(synk): for Dh < 128, emit a head-packed (Lq, H*Dh) lane-dense output
    # slab instead of per-head (tq, Dh) blocks to avoid masked partial stores.
    out = pl.pallas_call(
        functools.partial(_flash_mha_kernel, scale=scale, causal=causal,
                          k_valid=k_valid, tq=tq, tk=tk),
        grid=(B, H, Lqp // tq, Lkp // tk),
        in_specs=[
            pl.BlockSpec((1, 1, tq, Dh), lambda b, h, qi, ki: (b, h, qi, 0)),
            pl.BlockSpec((1, 1, tk, Dh), lambda b, h, qi, ki: (b, h, ki, 0)),
            pl.BlockSpec((1, 1, tk, Dh), lambda b, h, qi, ki: (b, h, ki, 0)),
        ],
        out_specs=pl.BlockSpec((1, 1, tq, Dh), lambda b, h, qi, ki: (b, h, qi, 0)),
        out_shape=jax.ShapeDtypeStruct((B, H, Lqp, Dh), jnp.float32),
        scratch_shapes=[pltpu.VMEM((tq, 1), jnp.float32),
                        pltpu.VMEM((tq, 1), jnp.float32),
                        pltpu.VMEM((tq, Dh), jnp.float32)],
        compiler_params=pltpu.CompilerParams(
            dimension_semantics=("parallel", "parallel", "parallel", "arbitrary")),
    )(qp, kp, vp)
    return out[:, :, :Lq, :]


# ----------------------------------------------------------------------------
# Model glue (plain JAX): embeddings, head split/merge, residual plumbing
# ----------------------------------------------------------------------------
def sinusoidal_pe(seq_len, d_model):
    pos = jnp.arange(seq_len, dtype=jnp.float32)[:, None]
    i = jnp.arange(d_model)[None, :]
    denom = jnp.power(10000.0, (2 * (i // 2)).astype(jnp.float32) / d_model)
    angle = pos / denom
    return jnp.where(i % 2 == 0, jnp.sin(angle), jnp.cos(angle))  # (L, D)


def self_attention_block(x, p, num_heads, causal):
    B, L, D = x.shape
    Dh = D // num_heads
    qkv = dense(x.reshape(B * L, D), p["w_qkv"], p["b_qkv"])       # fused QKV
    qkv = qkv.reshape(B, L, 3, num_heads, Dh).transpose(2, 0, 3, 1, 4)
    o = flash_mha(qkv[0], qkv[1], qkv[2], causal=causal)           # (B,H,L,Dh)
    o = o.transpose(0, 2, 1, 3).reshape(B * L, D)
    return dense(o, p["wo"], p["bo"]).reshape(B, L, D)


def cross_attention_block(x_q, x_kv, p, num_heads):
    B, Lq, D = x_q.shape
    Lk = x_kv.shape[1]
    Dh = D // num_heads
    q = dense(x_q.reshape(B * Lq, D), p["wq"], p["bq"])
    q = q.reshape(B, Lq, num_heads, Dh).transpose(0, 2, 1, 3)
    kv = dense(x_kv.reshape(B * Lk, D), p["w_kv"], p["b_kv"])      # fused KV
    kv = kv.reshape(B, Lk, 2, num_heads, Dh).transpose(2, 0, 3, 1, 4)
    o = flash_mha(q, kv[0], kv[1], causal=False)
    o = o.transpose(0, 2, 1, 3).reshape(B * Lq, D)
    return dense(o, p["wo"], p["bo"]).reshape(B, Lq, D)


def feed_forward(x, p):
    B, L, D = x.shape
    h = dense(x.reshape(B * L, D), p["w1"], p["b1"], activation="relu")
    return dense(h, p["w2"], p["b2"]).reshape(B, L, D)


def encoder_layer(x, p, num_heads):
    a = self_attention_block(x, p["attn"], num_heads, causal=False)
    x = add_layer_norm(x, a, p["ln1_g"], p["ln1_b"])
    f = feed_forward(x, p["ffn"])
    x = add_layer_norm(x, f, p["ln2_g"], p["ln2_b"])
    return x


def decoder_layer(x, enc_out, p, num_heads):
    a = self_attention_block(x, p["self_attn"], num_heads, causal=True)
    x = add_layer_norm(x, a, p["ln1_g"], p["ln1_b"])
    c = cross_attention_block(x, enc_out, p["cross_attn"], num_heads)
    x = add_layer_norm(x, c, p["ln2_g"], p["ln2_b"])
    f = feed_forward(x, p["ffn"])
    x = add_layer_norm(x, f, p["ln3_g"], p["ln3_b"])
    return x


def rshift(t, pad_token_id):
    B = t.shape[0]
    first = jnp.full((B, 1), pad_token_id, dtype=t.dtype)
    return jnp.concatenate([first, t[:, :-1]], axis=1)


def transformer_forward(params, s, t, *, num_heads, pad_token_id=0):
    B, Ls = s.shape
    _, Lt = t.shape
    d_model = params["enc"]["emb"].shape[1]
    pe = sinusoidal_pe(max(Ls, Lt), d_model)

    # Encoder (self_attn_square_mask is all-True -> additive constant -> no-op)
    enc_x = jnp.take(params["enc"]["emb"], s, axis=0) + pe[None, :Ls, :]
    enc_out = encoder_layer(enc_x, params["enc"]["layer"], num_heads)

    # Decoder on right-shifted targets (causal mask generated in-kernel)
    t_shift = rshift(t, pad_token_id)
    dec_x = jnp.take(params["dec"]["emb"], t_shift, axis=0) + pe[None, :Lt, :]
    dec_out = decoder_layer(dec_x, enc_out, params["dec"]["layer"], num_heads)

    # Final projection to dst vocab + fused softmax
    dst_vocab = params["out_w"].shape[1]
    prob = dense(dec_out.reshape(B * Lt, d_model), params["out_w"],
                 params["out_b"], activation="softmax")
    return prob.reshape(B, Lt, dst_vocab)


# ----------------------------------------------------------------------------
# Deterministic parameter init (matmul weights stored in bf16, rest f32)
# ----------------------------------------------------------------------------
def _linear_w(key, d_in, d_out, scale=0.02):
    return (jax.random.normal(key, (d_in, d_out), jnp.float32) * scale
            ).astype(jnp.bfloat16)


def _self_attn_params(key, d_model):
    k1, k2 = jax.random.split(key)
    return {"w_qkv": _linear_w(k1, d_model, 3 * d_model),
            "b_qkv": jnp.zeros((3 * d_model,), jnp.float32),
            "wo": _linear_w(k2, d_model, d_model),
            "bo": jnp.zeros((d_model,), jnp.float32)}


def _cross_attn_params(key, d_model):
    k1, k2, k3 = jax.random.split(key, 3)
    return {"wq": _linear_w(k1, d_model, d_model),
            "bq": jnp.zeros((d_model,), jnp.float32),
            "w_kv": _linear_w(k2, d_model, 2 * d_model),
            "b_kv": jnp.zeros((2 * d_model,), jnp.float32),
            "wo": _linear_w(k3, d_model, d_model),
            "bo": jnp.zeros((d_model,), jnp.float32)}


def _ffn_params(key, d_model, d_ff):
    k1, k2 = jax.random.split(key)
    return {"w1": _linear_w(k1, d_model, d_ff),
            "b1": jnp.zeros((d_ff,), jnp.float32),
            "w2": _linear_w(k2, d_ff, d_model),
            "b2": jnp.zeros((d_model,), jnp.float32)}


def init_transformer_params(key, src_vocab, dst_vocab, d_model, d_ff):
    keys = jax.random.split(key, 8)
    ones = jnp.ones((d_model,), jnp.float32)
    zeros = jnp.zeros((d_model,), jnp.float32)

    enc_layer = {"attn": _self_attn_params(keys[0], d_model),
                 "ffn": _ffn_params(keys[1], d_model, d_ff),
                 "ln1_g": ones, "ln1_b": zeros,
                 "ln2_g": ones, "ln2_b": zeros}
    dec_layer = {"self_attn": _self_attn_params(keys[2], d_model),
                 "cross_attn": _cross_attn_params(keys[3], d_model),
                 "ffn": _ffn_params(keys[4], d_model, d_ff),
                 "ln1_g": ones, "ln1_b": zeros,
                 "ln2_g": ones, "ln2_b": zeros,
                 "ln3_g": ones, "ln3_b": zeros}
    return {
        "enc": {"emb": jax.random.normal(keys[6], (src_vocab, d_model), jnp.float32),
                "layer": enc_layer},
        "dec": {"emb": jax.random.normal(keys[7], (dst_vocab, d_model), jnp.float32),
                "layer": dec_layer},
        "out_w": _linear_w(keys[5], d_model, dst_vocab),
        "out_b": jnp.zeros((dst_vocab,), jnp.float32),
    }


# ----------------------------------------------------------------------------
# Pure-JAX f32 reference (same math / mask semantics) for correctness checking
# ----------------------------------------------------------------------------
def _reference_forward(params, s, t, *, num_heads, pad_token_id=0):
    f32 = jnp.float32

    def lin(x, w, b):
        return x @ w.astype(f32) + b.astype(f32)

    def ln(x, g, b, eps=1e-5):
        mu = jnp.mean(x, axis=-1, keepdims=True)
        var = jnp.mean((x - mu) ** 2, axis=-1, keepdims=True)
        return (x - mu) * jax.lax.rsqrt(var + eps) * g + b

    def softmax(x):
        x = x - jnp.max(x, axis=-1, keepdims=True)
        e = jnp.exp(x)
        return e / jnp.sum(e, axis=-1, keepdims=True)

    def split_heads(x, B, L):
        Dh = x.shape[-1] // num_heads
        return x.reshape(B, L, num_heads, Dh).transpose(0, 2, 1, 3)

    def mha(q, k, v, causal):
        B, H, Lq, Dh = q.shape
        Lk = k.shape[2]
        sc = jnp.einsum("bhqd,bhkd->bhqk", q, k) / float(Dh) ** 0.5
        if causal:
            m = jnp.triu(jnp.ones((Lq, Lk), bool), k=1)
            sc = sc + jnp.where(m, NEG_INF, 0.0)
        p = softmax(sc)
        o = jnp.einsum("bhqk,bhkd->bhqd", p, v)
        return o.transpose(0, 2, 1, 3).reshape(B, Lq, H * Dh)

    def self_attn(x, p, causal):
        B, L, _ = x.shape
        qkv = lin(x, p["w_qkv"], p["b_qkv"])
        q, k, v = jnp.split(qkv, 3, axis=-1)
        o = mha(split_heads(q, B, L), split_heads(k, B, L), split_heads(v, B, L), causal)
        return lin(o, p["wo"], p["bo"])

    def cross_attn(xq, xkv, p):
        B, Lq, _ = xq.shape
        Lk = xkv.shape[1]
        q = split_heads(lin(xq, p["wq"], p["bq"]), B, Lq)
        k, v = jnp.split(lin(xkv, p["w_kv"], p["b_kv"]), 2, axis=-1)
        o = mha(q, split_heads(k, B, Lk), split_heads(v, B, Lk), False)
        return lin(o, p["wo"], p["bo"])

    def ffn(x, p):
        return lin(jnp.maximum(lin(x, p["w1"], p["b1"]), 0.0), p["w2"], p["b2"])

    B, Ls = s.shape
    _, Lt = t.shape
    d_model = params["enc"]["emb"].shape[1]
    pe = sinusoidal_pe(max(Ls, Lt), d_model)

    ep = params["enc"]["layer"]
    x = jnp.take(params["enc"]["emb"], s, axis=0) + pe[None, :Ls, :]
    x = ln(x + self_attn(x, ep["attn"], False), ep["ln1_g"], ep["ln1_b"])
    x = ln(x + ffn(x, ep["ffn"]), ep["ln2_g"], ep["ln2_b"])
    enc_out = x

    dp = params["dec"]["layer"]
    y = jnp.take(params["dec"]["emb"], rshift(t, pad_token_id), axis=0) + pe[None, :Lt, :]
    y = ln(y + self_attn(y, dp["self_attn"], True), dp["ln1_g"], dp["ln1_b"])
    y = ln(y + cross_attn(y, enc_out, dp["cross_attn"]), dp["ln2_g"], dp["ln2_b"])
    y = ln(y + ffn(y, dp["ffn"]), dp["ln3_g"], dp["ln3_b"])

    logits = y @ params["out_w"].astype(f32) + params["out_b"]
    return softmax(logits)


# ----------------------------------------------------------------------------
if __name__ == "__main__":
    src_vocab, dst_vocab = 17, 19
    seq_len, num_heads, d_model, d_ff = 8, 4, 32, 64
    batch = 2

    root = jax.random.PRNGKey(0)
    kp, ks, kt = jax.random.split(root, 3)
    params = init_transformer_params(kp, src_vocab, dst_vocab, d_model, d_ff)

    s = jax.random.randint(ks, (batch, seq_len), 0, src_vocab, dtype=jnp.int32)
    t = jax.random.randint(kt, (batch, seq_len), 0, dst_vocab, dtype=jnp.int32)

    fwd = jax.jit(functools.partial(transformer_forward,
                                    num_heads=num_heads, pad_token_id=0))
    prob = jax.block_until_ready(fwd(params, s, t))

    assert prob.shape == (batch, seq_len, dst_vocab), prob.shape
    assert bool(jnp.all(jnp.isfinite(prob)))
    row_sums = jnp.sum(prob, axis=-1)
    assert bool(jnp.all(jnp.abs(row_sums - 1.0) < 1e-2)), row_sums

    ref = _reference_forward(params, s, t, num_heads=num_heads, pad_token_id=0)
    max_err = float(jnp.max(jnp.abs(prob - ref)))
    assert max_err < 2e-2, max_err

    print("KERNEL_OK")
</pallas_src>

<mosaic_0001>
module attributes {stable_mosaic.version = 11 : i64} {
  func.func @_dense_kernel(%arg0: i32, %arg1: i32, %arg2: i32, %arg3: memref<16x128xbf16, #tpu.memory_space<vmem>>, %arg4: memref<128x128xbf16, #tpu.memory_space<vmem>>, %arg5: memref<1x128xf32, #tpu.memory_space<vmem>>, %arg6: memref<16x128xf32, #tpu.memory_space<vmem>>, %arg7: memref<16x128xf32, #tpu.memory_space<vmem>>) attributes {dimension_semantics = [#tpu.dimension_semantics<parallel>, #tpu.dimension_semantics<parallel>, #tpu.dimension_semantics<arbitrary>], iteration_bounds = array<i64: 1, 1, 1>, scalar_prefetch = 0 : i64, scratch_operands = 1 : i64, tpu.core_type = #tpu.core_type<tc>, window_params = [{transform_indices = @transform_0, window_bounds = array<i64: 16, 128>}, {transform_indices = @transform_1, window_bounds = array<i64: 128, 128>}, {transform_indices = @transform_2, window_bounds = array<i64: 1, 128>}, {transform_indices = @transform_3, window_bounds = array<i64: 16, 128>}]} {
    %c0_i32 = arith.constant 0 : i32
    %0 = arith.cmpi eq, %arg2, %c0_i32 : i32
    %1 = arith.extui %0 : i1 to i32
    %c0_i32_0 = arith.constant 0 : i32
    %2 = arith.cmpi ne, %1, %c0_i32_0 : i32
    scf.if %2 {
      %cst_10 = arith.constant 0.000000e+00 : f32
      %12 = vector.broadcast %cst_10 : f32 to vector<16x128xf32>
      %c0_11 = arith.constant 0 : index
      %c0_12 = arith.constant 0 : index
      %13 = vector.load %arg7[%c0_11, %c0_12] : memref<16x128xf32, #tpu.memory_space<vmem>>, vector<16x128xf32>
      tpu.vector_store %arg7[%c0_11, %c0_12], %12 {strides = array<i32>} : memref<16x128xf32, #tpu.memory_space<vmem>>, vector<16x128xf32>,
    } else {
    }
    %c0 = arith.constant 0 : index
    %c0_1 = arith.constant 0 : index
    %3 = vector.load %arg7[%c0, %c0_1] : memref<16x128xf32, #tpu.memory_space<vmem>>, vector<16x128xf32>
    %c0_2 = arith.constant 0 : index
    %c0_3 = arith.constant 0 : index
    %4 = vector.load %arg3[%c0_2, %c0_3] : memref<16x128xbf16, #tpu.memory_space<vmem>>, vector<16x128xbf16>
    %c0_4 = arith.constant 0 : index
    %c0_5 = arith.constant 0 : index
    %5 = vector.load %arg4[%c0_4, %c0_5] : memref<128x128xbf16, #tpu.memory_space<vmem>>, vector<128x128xbf16>
    %cst = arith.constant dense<0.000000e+00> : vector<16x128xf32>
    %6 = tpu.matmul %4, %5, %cst {dimension_numbers = #tpu.dot_dimension_numbers<[1], [0], [0], [1], [0, 0, 1, 1], [], []>} : vector<16x128xbf16>, vector<128x128xbf16>, vector<16x128xf32> -> vector<16x128xf32>
    %7 = arith.addf %3, %6 : vector<16x128xf32>
    %c0_6 = arith.constant 0 : index
    %c0_7 = arith.constant 0 : index
    %8 = vector.load %arg7[%c0_6, %c0_7] : memref<16x128xf32, #tpu.memory_space<vmem>>, vector<16x128xf32>
    tpu.vector_store %arg7[%c0_6, %c0_7], %7 {strides = array<i32>} : memref<16x128xf32, #tpu.memory_space<vmem>>, vector<16x128xf32>,
    %c0_i32_8 = arith.constant 0 : i32
    %9 = arith.cmpi eq, %arg2, %c0_i32_8 : i32
    %10 = arith.extui %9 : i1 to i32
    %c0_i32_9 = arith.constant 0 : i32
    %11 = arith.cmpi ne, %10, %c0_i32_9 : i32
    scf.if %11 {
      %c0_10 = arith.constant 0 : index
      %c0_11 = arith.constant 0 : index
      %12 = vector.load %arg7[%c0_10, %c0_11] : memref<16x128xf32, #tpu.memory_space<vmem>>, vector<16x128xf32>
      %c0_12 = arith.constant 0 : index
      %c0_13 = arith.constant 0 : index
      %13 = vector.load %arg5[%c0_12, %c0_13] : memref<1x128xf32, #tpu.memory_space<vmem>>, vector<1x128xf32>
      %14 = vector.broadcast %13 : vector<1x128xf32> to vector<16x128xf32>
      %15 = arith.addf %12, %14 : vector<16x128xf32>
      %c0_14 = arith.constant 0 : index
      %c0_15 = arith.constant 0 : index
      %16 = vector.load %arg6[%c0_14, %c0_15] : memref<16x128xf32, #tpu.memory_space<vmem>>, vector<16x128xf32>
      tpu.vector_store %arg6[%c0_14, %c0_15], %15 {strides = array<i32>} : memref<16x128xf32, #tpu.memory_space<vmem>>, vector<16x128xf32>,
    } else {
    }
    return
  }
  func.func @transform_0(%arg0: i32, %arg1: i32, %arg2: i32) -> (i32, i32) {
    %c0_i32 = arith.constant 0 : i32
    return %arg0, %arg2 : i32, i32
  }
  func.func @transform_1(%arg0: i32, %arg1: i32, %arg2: i32) -> (i32, i32) {
    %c0_i32 = arith.constant 0 : i32
    return %arg2, %arg1 : i32, i32
  }
  func.func @transform_2(%arg0: i32, %arg1: i32, %arg2: i32) -> (i32, i32) {
    %c0_i32 = arith.constant 0 : i32
    %c0_i32_0 = arith.constant 0 : i32
    return %c0_i32, %arg1 : i32, i32
  }
  func.func @transform_3(%arg0: i32, %arg1: i32, %arg2: i32) -> (i32, i32) {
    %c0_i32 = arith.constant 0 : i32
    return %arg0, %arg1 : i32, i32
  }
}

module attributes {stable_mosaic.version = 11 : i64} {
  func.func @_flash_mha_kernel(%arg0: i32, %arg1: i32, %arg2: i32, %arg3: i32, %arg4: memref<1x1x8x8xbf16, #tpu.memory_space<vmem>>, %arg5: memref<1x1x8x8xbf16, #tpu.memory_space<vmem>>, %arg6: memref<1x1x8x8xbf16, #tpu.memory_space<vmem>>, %arg7: memref<1x1x8x8xf32, #tpu.memory_space<vmem>>, %arg8: memref<8x1xf32, #tpu.memory_space<vmem>>, %arg9: memref<8x1xf32, #tpu.memory_space<vmem>>, %arg10: memref<8x8xf32, #tpu.memory_space<vmem>>) attributes {dimension_semantics = [#tpu.dimension_semantics<parallel>, #tpu.dimension_semantics<parallel>, #tpu.dimension_semantics<parallel>, #tpu.dimension_semantics<arbitrary>], iteration_bounds = array<i64: 2, 4, 1, 1>, scalar_prefetch = 0 : i64, scratch_operands = 3 : i64, tpu.core_type = #tpu.core_type<tc>, window_params = [{transform_indices = @transform_0, window_bounds = array<i64: 1, 1, 8, 8>}, {transform_indices = @transform_1, window_bounds = array<i64: 1, 1, 8, 8>}, {transform_indices = @transform_2, window_bounds = array<i64: 1, 1, 8, 8>}, {transform_indices = @transform_3, window_bounds = array<i64: 1, 1, 8, 8>}]} {
    %c0_i32 = arith.constant 0 : i32
    %0 = arith.cmpi eq, %arg3, %c0_i32 : i32
    %1 = arith.extui %0 : i1 to i32
    %c0_i32_0 = arith.constant 0 : i32
    %2 = arith.cmpi ne, %1, %c0_i32_0 : i32
    scf.if %2 {
      %cst_33 = arith.constant 0xFF800000 : f32
      %52 = vector.broadcast %cst_33 : f32 to vector<8x1xf32>
      %c0_34 = arith.constant 0 : index
      %c0_35 = arith.constant 0 : index
      %53 = vector.load %arg8[%c0_34, %c0_35] : memref<8x1xf32, #tpu.memory_space<vmem>>, vector<8x1xf32>
      tpu.vector_store %arg8[%c0_34, %c0_35], %52 {strides = array<i32>} : memref<8x1xf32, #tpu.memory_space<vmem>>, vector<8x1xf32>,
      %cst_36 = arith.constant 0.000000e+00 : f32
      %54 = vector.broadcast %cst_36 : f32 to vector<8x1xf32>
      %c0_37 = arith.constant 0 : index
      %c0_38 = arith.constant 0 : index
      %55 = vector.load %arg9[%c0_37, %c0_38] : memref<8x1xf32, #tpu.memory_space<vmem>>, vector<8x1xf32>
      tpu.vector_store %arg9[%c0_37, %c0_38], %54 {strides = array<i32>} : memref<8x1xf32, #tpu.memory_space<vmem>>, vector<8x1xf32>,
      %cst_39 = arith.constant 0.000000e+00 : f32
      %56 = vector.broadcast %cst_39 : f32 to vector<8x8xf32>
      %c0_40 = arith.constant 0 : index
      %c0_41 = arith.constant 0 : index
      %57 = vector.load %arg10[%c0_40, %c0_41] : memref<8x8xf32, #tpu.memory_space<vmem>>, vector<8x8xf32>
      tpu.vector_store %arg10[%c0_40, %c0_41], %56 {strides = array<i32>} : memref<8x8xf32, #tpu.memory_space<vmem>>, vector<8x8xf32>,
    } else {
    }
    %c0 = arith.constant 0 : index
    %c0_1 = arith.constant 0 : index
    %c0_2 = arith.constant 0 : index
    %c0_3 = arith.constant 0 : index
    %3 = vector.load %arg4[%c0, %c0_1, %c0_2, %c0_3] : memref<1x1x8x8xbf16, #tpu.memory_space<vmem>>, vector<1x1x8x8xbf16>
    %4 = vector.shape_cast %3 : vector<1x1x8x8xbf16> to vector<8x8xbf16>
    %c0_4 = arith.constant 0 : index
    %c0_5 = arith.constant 0 : index
    %c0_6 = arith.constant 0 : index
    %c0_7 = arith.constant 0 : index
    %5 = vector.load %arg5[%c0_4, %c0_5, %c0_6, %c0_7] : memref<1x1x8x8xbf16, #tpu.memory_space<vmem>>, vector<1x1x8x8xbf16>
    %6 = vector.shape_cast %5 : vector<1x1x8x8xbf16> to vector<8x8xbf16>
    %c0_8 = arith.constant 0 : index
    %c0_9 = arith.constant 0 : index
    %c0_10 = arith.constant 0 : index
    %c0_11 = arith.constant 0 : index
    %7 = vector.load %arg6[%c0_8, %c0_9, %c0_10, %c0_11] : memref<1x1x8x8xbf16, #tpu.memory_space<vmem>>, vector<1x1x8x8xbf16>
    %8 = vector.shape_cast %7 : vector<1x1x8x8xbf16> to vector<8x8xbf16>
    %9 = tpu.transpose %6, [1, 0] : vector<8x8xbf16> -> vector<8x8xbf16>
    %cst = arith.constant dense<0.000000e+00> : vector<8x8xf32>
    %10 = tpu.matmul %4, %9, %cst {dimension_numbers = #tpu.dot_dimension_numbers<[1], [0], [0], [1], [0, 0, 1, 1], [], []>} : vector<8x8xbf16>, vector<8x8xbf16>, vector<8x8xf32> -> vector<8x8xf32>
    %cst_12 = arith.constant 0.353553385 : f32
    %11 = vector.broadcast %cst_12 : f32 to vector<8x8xf32>
    %12 = arith.mulf %10, %11 : vector<8x8xf32>
    %c8_i32 = arith.constant 8 : i32
    %13 = arith.muli %arg2, %c8_i32 : i32
    %14 = tpu.iota {dimensions = array<i32: 0>} : vector<8x8xi32>
    %15 = vector.broadcast %13 : i32 to vector<8x8xi32>
    %16 = arith.addi %15, %14 : vector<8x8xi32>
    %c8_i32_13 = arith.constant 8 : i32
    %17 = arith.muli %arg3, %c8_i32_13 : i32
    %18 = tpu.iota {dimensions = array<i32: 1>} : vector<8x8xi32>
    %19 = vector.broadcast %17 : i32 to vector<8x8xi32>
    %20 = arith.addi %19, %18 : vector<8x8xi32>
    %21 = arith.cmpi sgt, %20, %16 : vector<8x8xi32>
    %cst_14 = arith.constant -1.000000e+09 : f32
    %cst_15 = arith.constant 0.000000e+00 : f32
    %22 = vector.broadcast %cst_14 : f32 to vector<8x8xf32>
    %23 = vector.broadcast %cst_15 : f32 to vector<8x8xf32>
    %24 = arith.select %21, %22, %23 : vector<8x8xi1>, vector<8x8xf32>
    %25 = arith.addf %12, %24 : vector<8x8xf32>
    %c0_16 = arith.constant 0 : index
    %c0_17 = arith.constant 0 : index
    %26 = vector.load %arg8[%c0_16, %c0_17] : memref<8x1xf32, #tpu.memory_space<vmem>>, vector<8x1xf32>
    %cst_18 = arith.constant dense<0xFF800000> : vector<8xf32>
    %27 = vector.multi_reduction <maximumf>, %25, %cst_18 [1] : vector<8x8xf32> to vector<8xf32>
    %28 = vector.shape_cast %27 : vector<8xf32> to vector<8x1xf32>
    %29 = arith.maximumf %26, %28 : vector<8x1xf32>
    %30 = arith.subf %26, %29 : vector<8x1xf32>
    %31 = math.exp %30 : vector<8x1xf32>
    %32 = vector.broadcast %29 : vector<8x1xf32> to vector<8x8xf32>
    %33 = arith.subf %25, %32 : vector<8x8xf32>
    %34 = math.exp %33 : vector<8x8xf32>
    %c0_19 = arith.constant 0 : index
    %c0_20 = arith.constant 0 : index
    %35 = vector.load %arg9[%c0_19, %c0_20] : memref<8x1xf32, #tpu.memory_space<vmem>>, vector<8x1xf32>
    %36 = arith.mulf %31, %35 : vector<8x1xf32>
    %cst_21 = arith.constant dense<0.000000e+00> : vector<8xf32>
    %37 = vector.multi_reduction <add>, %34, %cst_21 [1] : vector<8x8xf32> to vector<8xf32>
    %38 = vector.shape_cast %37 : vector<8xf32> to vector<8x1xf32>
    %39 = arith.addf %36, %38 : vector<8x1xf32>
    %c0_22 = arith.constant 0 : index
    %c0_23 = arith.constant 0 : index
    %40 = vector.load %arg9[%c0_22, %c0_23] : memref<8x1xf32, #tpu.memory_space<vmem>>, vector<8x1xf32>
    tpu.vector_store %arg9[%c0_22, %c0_23], %39 {strides = array<i32>} : memref<8x1xf32, #tpu.memory_space<vmem>>, vector<8x1xf32>,
    %c0_24 = arith.constant 0 : index
    %c0_25 = arith.constant 0 : index
    %41 = vector.load %arg10[%c0_24, %c0_25] : memref<8x8xf32, #tpu.memory_space<vmem>>, vector<8x8xf32>
    %42 = vector.broadcast %31 : vector<8x1xf32> to vector<8x8xf32>
    %43 = arith.mulf %42, %41 : vector<8x8xf32>
    %44 = arith.truncf %34 : vector<8x8xf32> to vector<8x8xbf16>
    %cst_26 = arith.constant dense<0.000000e+00> : vector<8x8xf32>
    %45 = tpu.matmul %44, %8, %cst_26 {dimension_numbers = #tpu.dot_dimension_numbers<[1], [0], [0], [1], [0, 0, 1, 1], [], []>} : vector<8x8xbf16>, vector<8x8xbf16>, vector<8x8xf32> -> vector<8x8xf32>
    %46 = arith.addf %43, %45 : vector<8x8xf32>
    %c0_27 = arith.constant 0 : index
    %c0_28 = arith.constant 0 : index
    %47 = vector.load %arg10[%c0_27, %c0_28] : memref<8x8xf32, #tpu.memory_space<vmem>>, vector<8x8xf32>
    tpu.vector_store %arg10[%c0_27, %c0_28], %46 {strides = array<i32>} : memref<8x8xf32, #tpu.memory_space<vmem>>, vector<8x8xf32>,
    %c0_29 = arith.constant 0 : index
    %c0_30 = arith.constant 0 : index
    %48 = vector.load %arg8[%c0_29, %c0_30] : memref<8x1xf32, #tpu.memory_space<vmem>>, vector<8x1xf32>
    tpu.vector_store %arg8[%c0_29, %c0_30], %29 {strides = array<i32>} : memref<8x1xf32, #tpu.memory_space<vmem>>, vector<8x1xf32>,
    %c0_i32_31 = arith.constant 0 : i32
    %49 = arith.cmpi eq, %arg3, %c0_i32_31 : i32
    %50 = arith.extui %49 : i1 to i32
    %c0_i32_32 = arith.constant 0 : i32
    %51 = arith.cmpi ne, %50, %c0_i32_32 : i32
    scf.if %51 {
      %c0_33 = arith.constant 0 : index
      %c0_34 = arith.constant 0 : index
      %52 = vector.load %arg10[%c0_33, %c0_34] : memref<8x8xf32, #tpu.memory_space<vmem>>, vector<8x8xf32>
      %c0_35 = arith.constant 0 : index
      %c0_36 = arith.constant 0 : index
      %53 = vector.load %arg9[%c0_35, %c0_36] : memref<8x1xf32, #tpu.memory_space<vmem>>, vector<8x1xf32>
      %54 = vector.broadcast %53 : vector<8x1xf32> to vector<8x8xf32>
      %55 = arith.divf %52, %54 : vector<8x8xf32>
      %c0_37 = arith.constant 0 : index
      %c0_38 = arith.constant 0 : index
      %c0_39 = arith.constant 0 : index
      %c0_40 = arith.constant 0 : index
      %56 = vector.load %arg7[%c0_37, %c0_38, %c0_39, %c0_40] : memref<1x1x8x8xf32, #tpu.memory_space<vmem>>, vector<1x1x8x8xf32>
      %57 = vector.shape_cast %56 : vector<1x1x8x8xf32> to vector<8x8xf32>
      %58 = vector.shape_cast %55 : vector<8x8xf32> to vector<1x1x8x8xf32>
      tpu.vector_store %arg7[%c0_37, %c0_38, %c0_39, %c0_40], %58 {strides = array<i32>} : memref<1x1x8x8xf32, #tpu.memory_space<vmem>>, vector<1x1x8x8xf32>,
    } else {
    }
    return
  }
  func.func @transform_0(%arg0: i32, %arg1: i32, %arg2: i32, %arg3: i32) -> (i32, i32, i32, i32) {
    %c0_i32 = arith.constant 0 : i32
    %c0_i32_0 = arith.constant 0 : i32
    return %arg0, %arg1, %arg2, %c0_i32 : i32, i32, i32, i32
  }
  func.func @transform_1(%arg0: i32, %arg1: i32, %arg2: i32, %arg3: i32) -> (i32, i32, i32, i32) {
    %c0_i32 = arith.constant 0 : i32
    %c0_i32_0 = arith.constant 0 : i32
    return %arg0, %arg1, %arg3, %c0_i32 : i32, i32, i32, i32
  }
  func.func @transform_2(%arg0: i32, %arg1: i32, %arg2: i32, %arg3: i32) -> (i32, i32, i32, i32) {
    %c0_i32 = arith.constant 0 : i32
    %c0_i32_0 = arith.constant 0 : i32
    return %arg0, %arg1, %arg3, %c0_i32 : i32, i32, i32, i32
  }
  func.func @transform_3(%arg0: i32, %arg1: i32, %arg2: i32, %arg3: i32) -> (i32, i32, i32, i32) {
    %c0_i32 = arith.constant 0 : i32
    %c0_i32_0 = arith.constant 0 : i32
    return %arg0, %arg1, %arg2, %c0_i32 : i32, i32, i32, i32
  }
}

module attributes {stable_mosaic.version = 11 : i64} {
  func.func @_add_layernorm_kernel(%arg0: i32, %arg1: memref<16x32xf32, #tpu.memory_space<vmem>>, %arg2: memref<16x32xf32, #tpu.memory_space<vmem>>, %arg3: memref<1x32xf32, #tpu.memory_space<vmem>>, %arg4: memref<1x32xf32, #tpu.memory_space<vmem>>, %arg5: memref<16x32xf32, #tpu.memory_space<vmem>>) attributes {dimension_semantics = [#tpu.dimension_semantics<parallel>], iteration_bounds = array<i64: 1>, scalar_prefetch = 0 : i64, scratch_operands = 0 : i64, tpu.core_type = #tpu.core_type<tc>, window_params = [{transform_indices = @transform_0, window_bounds = array<i64: 16, 32>}, {transform_indices = @transform_1, window_bounds = array<i64: 16, 32>}, {pipeline_mode = #tpu.pipeline_mode<synchronous>, transform_indices = @transform_2, window_bounds = array<i64: 1, 32>}, {pipeline_mode = #tpu.pipeline_mode<synchronous>, transform_indices = @transform_3, window_bounds = array<i64: 1, 32>}, {transform_indices = @transform_4, window_bounds = array<i64: 16, 32>}]} {
    %c0 = arith.constant 0 : index
    %c0_0 = arith.constant 0 : index
    %0 = vector.load %arg1[%c0, %c0_0] : memref<16x32xf32, #tpu.memory_space<vmem>>, vector<16x32xf32>
    %c0_1 = arith.constant 0 : index
    %c0_2 = arith.constant 0 : index
    %1 = vector.load %arg2[%c0_1, %c0_2] : memref<16x32xf32, #tpu.memory_space<vmem>>, vector<16x32xf32>
    %2 = arith.addf %0, %1 : vector<16x32xf32>
    %cst = arith.constant dense<0.000000e+00> : vector<16xf32>
    %3 = vector.multi_reduction <add>, %2, %cst [1] : vector<16x32xf32> to vector<16xf32>
    %4 = vector.shape_cast %3 : vector<16xf32> to vector<16x1xf32>
    %cst_3 = arith.constant 3.200000e+01 : f32
    %5 = vector.broadcast %cst_3 : f32 to vector<16x1xf32>
    %6 = arith.divf %4, %5 : vector<16x1xf32>
    %7 = vector.broadcast %6 : vector<16x1xf32> to vector<16x32xf32>
    %8 = arith.subf %2, %7 : vector<16x32xf32>
    %9 = arith.mulf %8, %8 : vector<16x32xf32>
    %cst_4 = arith.constant dense<0.000000e+00> : vector<16xf32>
    %10 = vector.multi_reduction <add>, %9, %cst_4 [1] : vector<16x32xf32> to vector<16xf32>
    %11 = vector.shape_cast %10 : vector<16xf32> to vector<16x1xf32>
    %cst_5 = arith.constant 3.200000e+01 : f32
    %12 = vector.broadcast %cst_5 : f32 to vector<16x1xf32>
    %13 = arith.divf %11, %12 : vector<16x1xf32>
    %14 = vector.broadcast %6 : vector<16x1xf32> to vector<16x32xf32>
    %15 = arith.subf %2, %14 : vector<16x32xf32>
    %cst_6 = arith.constant 9.99999974E-6 : f32
    %16 = vector.broadcast %cst_6 : f32 to vector<16x1xf32>
    %17 = arith.addf %13, %16 : vector<16x1xf32>
    %18 = math.rsqrt %17 : vector<16x1xf32>
    %19 = vector.broadcast %18 : vector<16x1xf32> to vector<16x32xf32>
    %20 = arith.mulf %15, %19 : vector<16x32xf32>
    %c0_7 = arith.constant 0 : index
    %c0_8 = arith.constant 0 : index
    %21 = vector.load %arg3[%c0_7, %c0_8] : memref<1x32xf32, #tpu.memory_space<vmem>>, vector<1x32xf32>
    %22 = vector.broadcast %21 : vector<1x32xf32> to vector<16x32xf32>
    %23 = arith.mulf %20, %22 : vector<16x32xf32>
    %c0_9 = arith.constant 0 : index
    %c0_10 = arith.constant 0 : index
    %24 = vector.load %arg4[%c0_9, %c0_10] : memref<1x32xf32, #tpu.memory_space<vmem>>, vector<1x32xf32>
    %25 = vector.broadcast %24 : vector<1x32xf32> to vector<16x32xf32>
    %26 = arith.addf %23, %25 : vector<16x32xf32>
    %c0_11 = arith.constant 0 : index
    %c0_12 = arith.constant 0 : index
    %27 = vector.load %arg5[%c0_11, %c0_12] : memref<16x32xf32, #tpu.memory_space<vmem>>, vector<16x32xf32>
    tpu.vector_store %arg5[%c0_11, %c0_12], %26 {strides = array<i32>} : memref<16x32xf32, #tpu.memory_space<vmem>>, vector<16x32xf32>,
    return
  }
  func.func @transform_0(%arg0: i32) -> (i32, i32) {
    %c0_i32 = arith.constant 0 : i32
    %c0_i32_0 = arith.constant 0 : i32
    return %arg0, %c0_i32 : i32, i32
  }
  func.func @transform_1(%arg0: i32) -> (i32, i32) {
    %c0_i32 = arith.constant 0 : i32
    %c0_i32_0 = arith.constant 0 : i32
    return %arg0, %c0_i32 : i32, i32
  }
  func.func @transform_2(%arg0: i32) -> (i32, i32) {
    %c0_i32 = arith.constant 0 : i32
    %c0_i32_0 = arith.constant 0 : i32
    %c0_i32_1 = arith.constant 0 : i32
    return %c0_i32, %c0_i32_0 : i32, i32
  }
  func.func @transform_3(%arg0: i32) -> (i32, i32) {
    %c0_i32 = arith.constant 0 : i32
    %c0_i32_0 = arith.constant 0 : i32
    %c0_i32_1 = arith.constant 0 : i32
    return %c0_i32, %c0_i32_0 : i32, i32
  }
  func.func @transform_4(%arg0: i32) -> (i32, i32) {
    %c0_i32 = arith.constant 0 : i32
    %c0_i32_0 = arith.constant 0 : i32
    return %arg0, %c0_i32 : i32, i32
  }
}

module attributes {stable_mosaic.version = 11 : i64} {
  func.func @_flash_mha_kernel(%arg0: i32, %arg1: i32, %arg2: i32, %arg3: i32, %arg4: memref<1x1x8x8xbf16, #tpu.memory_space<vmem>>, %arg5: memref<1x1x8x8xbf16, #tpu.memory_space<vmem>>, %arg6: memref<1x1x8x8xbf16, #tpu.memory_space<vmem>>, %arg7: memref<1x1x8x8xf32, #tpu.memory_space<vmem>>, %arg8: memref<8x1xf32, #tpu.memory_space<vmem>>, %arg9: memref<8x1xf32, #tpu.memory_space<vmem>>, %arg10: memref<8x8xf32, #tpu.memory_space<vmem>>) attributes {dimension_semantics = [#tpu.dimension_semantics<parallel>, #tpu.dimension_semantics<parallel>, #tpu.dimension_semantics<parallel>, #tpu.dimension_semantics<arbitrary>], iteration_bounds = array<i64: 2, 4, 1, 1>, scalar_prefetch = 0 : i64, scratch_operands = 3 : i64, tpu.core_type = #tpu.core_type<tc>, window_params = [{transform_indices = @transform_0, window_bounds = array<i64: 1, 1, 8, 8>}, {transform_indices = @transform_1, window_bounds = array<i64: 1, 1, 8, 8>}, {transform_indices = @transform_2, window_bounds = array<i64: 1, 1, 8, 8>}, {transform_indices = @transform_3, window_bounds = array<i64: 1, 1, 8, 8>}]} {
    %c0_i32 = arith.constant 0 : i32
    %0 = arith.cmpi eq, %arg3, %c0_i32 : i32
    %1 = arith.extui %0 : i1 to i32
    %c0_i32_0 = arith.constant 0 : i32
    %2 = arith.cmpi ne, %1, %c0_i32_0 : i32
    scf.if %2 {
      %cst_30 = arith.constant 0xFF800000 : f32
      %39 = vector.broadcast %cst_30 : f32 to vector<8x1xf32>
      %c0_31 = arith.constant 0 : index
      %c0_32 = arith.constant 0 : index
      %40 = vector.load %arg8[%c0_31, %c0_32] : memref<8x1xf32, #tpu.memory_space<vmem>>, vector<8x1xf32>
      tpu.vector_store %arg8[%c0_31, %c0_32], %39 {strides = array<i32>} : memref<8x1xf32, #tpu.memory_space<vmem>>, vector<8x1xf32>,
      %cst_33 = arith.constant 0.000000e+00 : f32
      %41 = vector.broadcast %cst_33 : f32 to vector<8x1xf32>
      %c0_34 = arith.constant 0 : index
      %c0_35 = arith.constant 0 : index
      %42 = vector.load %arg9[%c0_34, %c0_35] : memref<8x1xf32, #tpu.memory_space<vmem>>, vector<8x1xf32>
      tpu.vector_store %arg9[%c0_34, %c0_35], %41 {strides = array<i32>} : memref<8x1xf32, #tpu.memory_space<vmem>>, vector<8x1xf32>,
      %cst_36 = arith.constant 0.000000e+00 : f32
      %43 = vector.broadcast %cst_36 : f32 to vector<8x8xf32>
      %c0_37 = arith.constant 0 : index
      %c0_38 = arith.constant 0 : index
      %44 = vector.load %arg10[%c0_37, %c0_38] : memref<8x8xf32, #tpu.memory_space<vmem>>, vector<8x8xf32>
      tpu.vector_store %arg10[%c0_37, %c0_38], %43 {strides = array<i32>} : memref<8x8xf32, #tpu.memory_space<vmem>>, vector<8x8xf32>,
    } else {
    }
    %c0 = arith.constant 0 : index
    %c0_1 = arith.constant 0 : index
    %c0_2 = arith.constant 0 : index
    %c0_3 = arith.constant 0 : index
    %3 = vector.load %arg4[%c0, %c0_1, %c0_2, %c0_3] : memref<1x1x8x8xbf16, #tpu.memory_space<vmem>>, vector<1x1x8x8xbf16>
    %4 = vector.shape_cast %3 : vector<1x1x8x8xbf16> to vector<8x8xbf16>
    %c0_4 = arith.constant 0 : index
    %c0_5 = arith.constant 0 : index
    %c0_6 = arith.constant 0 : index
    %c0_7 = arith.constant 0 : index
    %5 = vector.load %arg5[%c0_4, %c0_5, %c0_6, %c0_7] : memref<1x1x8x8xbf16, #tpu.memory_space<vmem>>, vector<1x1x8x8xbf16>
    %6 = vector.shape_cast %5 : vector<1x1x8x8xbf16> to vector<8x8xbf16>
    %c0_8 = arith.constant 0 : index
    %c0_9 = arith.constant 0 : index
    %c0_10 = arith.constant 0 : index
    %c0_11 = arith.constant 0 : index
    %7 = vector.load %arg6[%c0_8, %c0_9, %c0_10, %c0_11] : memref<1x1x8x8xbf16, #tpu.memory_space<vmem>>, vector<1x1x8x8xbf16>
    %8 = vector.shape_cast %7 : vector<1x1x8x8xbf16> to vector<8x8xbf16>
    %9 = tpu.transpose %6, [1, 0] : vector<8x8xbf16> -> vector<8x8xbf16>
    %cst = arith.constant dense<0.000000e+00> : vector<8x8xf32>
    %10 = tpu.matmul %4, %9, %cst {dimension_numbers = #tpu.dot_dimension_numbers<[1], [0], [0], [1], [0, 0, 1, 1], [], []>} : vector<8x8xbf16>, vector<8x8xbf16>, vector<8x8xf32> -> vector<8x8xf32>
    %cst_12 = arith.constant 0.353553385 : f32
    %11 = vector.broadcast %cst_12 : f32 to vector<8x8xf32>
    %12 = arith.mulf %10, %11 : vector<8x8xf32>
    %c0_13 = arith.constant 0 : index
    %c0_14 = arith.constant 0 : index
    %13 = vector.load %arg8[%c0_13, %c0_14] : memref<8x1xf32, #tpu.memory_space<vmem>>, vector<8x1xf32>
    %cst_15 = arith.constant dense<0xFF800000> : vector<8xf32>
    %14 = vector.multi_reduction <maximumf>, %12, %cst_15 [1] : vector<8x8xf32> to vector<8xf32>
    %15 = vector.shape_cast %14 : vector<8xf32> to vector<8x1xf32>
    %16 = arith.maximumf %13, %15 : vector<8x1xf32>
    %17 = arith.subf %13, %16 : vector<8x1xf32>
    %18 = math.exp %17 : vector<8x1xf32>
    %19 = vector.broadcast %16 : vector<8x1xf32> to vector<8x8xf32>
    %20 = arith.subf %12, %19 : vector<8x8xf32>
    %21 = math.exp %20 : vector<8x8xf32>
    %c0_16 = arith.constant 0 : index
    %c0_17 = arith.constant 0 : index
    %22 = vector.load %arg9[%c0_16, %c0_17] : memref<8x1xf32, #tpu.memory_space<vmem>>, vector<8x1xf32>
    %23 = arith.mulf %18, %22 : vector<8x1xf32>
    %cst_18 = arith.constant dense<0.000000e+00> : vector<8xf32>
    %24 = vector.multi_reduction <add>, %21, %cst_18 [1] : vector<8x8xf32> to vector<8xf32>
    %25 = vector.shape_cast %24 : vector<8xf32> to vector<8x1xf32>
    %26 = arith.addf %23, %25 : vector<8x1xf32>
    %c0_19 = arith.constant 0 : index
    %c0_20 = arith.constant 0 : index
    %27 = vector.load %arg9[%c0_19, %c0_20] : memref<8x1xf32, #tpu.memory_space<vmem>>, vector<8x1xf32>
    tpu.vector_store %arg9[%c0_19, %c0_20], %26 {strides = array<i32>} : memref<8x1xf32, #tpu.memory_space<vmem>>, vector<8x1xf32>,
    %c0_21 = arith.constant 0 : index
    %c0_22 = arith.constant 0 : index
    %28 = vector.load %arg10[%c0_21, %c0_22] : memref<8x8xf32, #tpu.memory_space<vmem>>, vector<8x8xf32>
    %29 = vector.broadcast %18 : vector<8x1xf32> to vector<8x8xf32>
    %30 = arith.mulf %29, %28 : vector<8x8xf32>
    %31 = arith.truncf %21 : vector<8x8xf32> to vector<8x8xbf16>
    %cst_23 = arith.constant dense<0.000000e+00> : vector<8x8xf32>
    %32 = tpu.matmul %31, %8, %cst_23 {dimension_numbers = #tpu.dot_dimension_numbers<[1], [0], [0], [1], [0, 0, 1, 1], [], []>} : vector<8x8xbf16>, vector<8x8xbf16>, vector<8x8xf32> -> vector<8x8xf32>
    %33 = arith.addf %30, %32 : vector<8x8xf32>
    %c0_24 = arith.constant 0 : index
    %c0_25 = arith.constant 0 : index
    %34 = vector.load %arg10[%c0_24, %c0_25] : memref<8x8xf32, #tpu.memory_space<vmem>>, vector<8x8xf32>
    tpu.vector_store %arg10[%c0_24, %c0_25], %33 {strides = array<i32>} : memref<8x8xf32, #tpu.memory_space<vmem>>, vector<8x8xf32>,
    %c0_26 = arith.constant 0 : index
    %c0_27 = arith.constant 0 : index
    %35 = vector.load %arg8[%c0_26, %c0_27] : memref<8x1xf32, #tpu.memory_space<vmem>>, vector<8x1xf32>
    tpu.vector_store %arg8[%c0_26, %c0_27], %16 {strides = array<i32>} : memref<8x1xf32, #tpu.memory_space<vmem>>, vector<8x1xf32>,
    %c0_i32_28 = arith.constant 0 : i32
    %36 = arith.cmpi eq, %arg3, %c0_i32_28 : i32
    %37 = arith.extui %36 : i1 to i32
    %c0_i32_29 = arith.constant 0 : i32
    %38 = arith.cmpi ne, %37, %c0_i32_29 : i32
    scf.if %38 {
      %c0_30 = arith.constant 0 : index
      %c0_31 = arith.constant 0 : index
      %39 = vector.load %arg10[%c0_30, %c0_31] : memref<8x8xf32, #tpu.memory_space<vmem>>, vector<8x8xf32>
      %c0_32 = arith.constant 0 : index
      %c0_33 = arith.constant 0 : index
      %40 = vector.load %arg9[%c0_32, %c0_33] : memref<8x1xf32, #tpu.memory_space<vmem>>, vector<8x1xf32>
      %41 = vector.broadcast %40 : vector<8x1xf32> to vector<8x8xf32>
      %42 = arith.divf %39, %41 : vector<8x8xf32>
      %c0_34 = arith.constant 0 : index
      %c0_35 = arith.constant 0 : index
      %c0_36 = arith.constant 0 : index
      %c0_37 = arith.constant 0 : index
      %43 = vector.load %arg7[%c0_34, %c0_35, %c0_36, %c0_37] : memref<1x1x8x8xf32, #tpu.memory_space<vmem>>, vector<1x1x8x8xf32>
      %44 = vector.shape_cast %43 : vector<1x1x8x8xf32> to vector<8x8xf32>
      %45 = vector.shape_cast %42 : vector<8x8xf32> to vector<1x1x8x8xf32>
      tpu.vector_store %arg7[%c0_34, %c0_35, %c0_36, %c0_37], %45 {strides = array<i32>} : memref<1x1x8x8xf32, #tpu.memory_space<vmem>>, vector<1x1x8x8xf32>,
    } else {
    }
    return
  }
  func.func @transform_0(%arg0: i32, %arg1: i32, %arg2: i32, %arg3: i32) -> (i32, i32, i32, i32) {
    %c0_i32 = arith.constant 0 : i32
    %c0_i32_0 = arith.constant 0 : i32
    return %arg0, %arg1, %arg2, %c0_i32 : i32, i32, i32, i32
  }
  func.func @transform_1(%arg0: i32, %arg1: i32, %arg2: i32, %arg3: i32) -> (i32, i32, i32, i32) {
    %c0_i32 = arith.constant 0 : i32
    %c0_i32_0 = arith.constant 0 : i32
    return %arg0, %arg1, %arg3, %c0_i32 : i32, i32, i32, i32
  }
  func.func @transform_2(%arg0: i32, %arg1: i32, %arg2: i32, %arg3: i32) -> (i32, i32, i32, i32) {
    %c0_i32 = arith.constant 0 : i32
    %c0_i32_0 = arith.constant 0 : i32
    return %arg0, %arg1, %arg3, %c0_i32 : i32, i32, i32, i32
  }
  func.func @transform_3(%arg0: i32, %arg1: i32, %arg2: i32, %arg3: i32) -> (i32, i32, i32, i32) {
    %c0_i32 = arith.constant 0 : i32
    %c0_i32_0 = arith.constant 0 : i32
    return %arg0, %arg1, %arg2, %c0_i32 : i32, i32, i32, i32
  }
}

module attributes {stable_mosaic.version = 11 : i64} {
  func.func @_dense_kernel(%arg0: i32, %arg1: i32, %arg2: i32, %arg3: memref<16x128xbf16, #tpu.memory_space<vmem>>, %arg4: memref<128x128xbf16, #tpu.memory_space<vmem>>, %arg5: memref<1x128xf32, #tpu.memory_space<vmem>>, %arg6: memref<16x128xf32, #tpu.memory_space<vmem>>, %arg7: memref<16x128xf32, #tpu.memory_space<vmem>>) attributes {dimension_semantics = [#tpu.dimension_semantics<parallel>, #tpu.dimension_semantics<parallel>, #tpu.dimension_semantics<arbitrary>], iteration_bounds = array<i64: 1, 1, 1>, scalar_prefetch = 0 : i64, scratch_operands = 1 : i64, tpu.core_type = #tpu.core_type<tc>, window_params = [{transform_indices = @transform_0, window_bounds = array<i64: 16, 128>}, {transform_indices = @transform_1, window_bounds = array<i64: 128, 128>}, {transform_indices = @transform_2, window_bounds = array<i64: 1, 128>}, {transform_indices = @transform_3, window_bounds = array<i64: 16, 128>}]} {
    %c0_i32 = arith.constant 0 : i32
    %0 = arith.cmpi eq, %arg2, %c0_i32 : i32
    %1 = arith.extui %0 : i1 to i32
    %c0_i32_0 = arith.constant 0 : i32
    %2 = arith.cmpi ne, %1, %c0_i32_0 : i32
    scf.if %2 {
      %cst_10 = arith.constant 0.000000e+00 : f32
      %12 = vector.broadcast %cst_10 : f32 to vector<16x128xf32>
      %c0_11 = arith.constant 0 : index
      %c0_12 = arith.constant 0 : index
      %13 = vector.load %arg7[%c0_11, %c0_12] : memref<16x128xf32, #tpu.memory_space<vmem>>, vector<16x128xf32>
      tpu.vector_store %arg7[%c0_11, %c0_12], %12 {strides = array<i32>} : memref<16x128xf32, #tpu.memory_space<vmem>>, vector<16x128xf32>,
    } else {
    }
    %c0 = arith.constant 0 : index
    %c0_1 = arith.constant 0 : index
    %3 = vector.load %arg7[%c0, %c0_1] : memref<16x128xf32, #tpu.memory_space<vmem>>, vector<16x128xf32>
    %c0_2 = arith.constant 0 : index
    %c0_3 = arith.constant 0 : index
    %4 = vector.load %arg3[%c0_2, %c0_3] : memref<16x128xbf16, #tpu.memory_space<vmem>>, vector<16x128xbf16>
    %c0_4 = arith.constant 0 : index
    %c0_5 = arith.constant 0 : index
    %5 = vector.load %arg4[%c0_4, %c0_5] : memref<128x128xbf16, #tpu.memory_space<vmem>>, vector<128x128xbf16>
    %cst = arith.constant dense<0.000000e+00> : vector<16x128xf32>
    %6 = tpu.matmul %4, %5, %cst {dimension_numbers = #tpu.dot_dimension_numbers<[1], [0], [0], [1], [0, 0, 1, 1], [], []>} : vector<16x128xbf16>, vector<128x128xbf16>, vector<16x128xf32> -> vector<16x128xf32>
    %7 = arith.addf %3, %6 : vector<16x128xf32>
    %c0_6 = arith.constant 0 : index
    %c0_7 = arith.constant 0 : index
    %8 = vector.load %arg7[%c0_6, %c0_7] : memref<16x128xf32, #tpu.memory_space<vmem>>, vector<16x128xf32>
    tpu.vector_store %arg7[%c0_6, %c0_7], %7 {strides = array<i32>} : memref<16x128xf32, #tpu.memory_space<vmem>>, vector<16x128xf32>,
    %c0_i32_8 = arith.constant 0 : i32
    %9 = arith.cmpi eq, %arg2, %c0_i32_8 : i32
    %10 = arith.extui %9 : i1 to i32
    %c0_i32_9 = arith.constant 0 : i32
    %11 = arith.cmpi ne, %10, %c0_i32_9 : i32
    scf.if %11 {
      %c0_10 = arith.constant 0 : index
      %c0_11 = arith.constant 0 : index
      %12 = vector.load %arg7[%c0_10, %c0_11] : memref<16x128xf32, #tpu.memory_space<vmem>>, vector<16x128xf32>
      %c0_12 = arith.constant 0 : index
      %c0_13 = arith.constant 0 : index
      %13 = vector.load %arg5[%c0_12, %c0_13] : memref<1x128xf32, #tpu.memory_space<vmem>>, vector<1x128xf32>
      %14 = vector.broadcast %13 : vector<1x128xf32> to vector<16x128xf32>
      %15 = arith.addf %12, %14 : vector<16x128xf32>
      %cst_14 = arith.constant 0.000000e+00 : f32
      %16 = vector.broadcast %cst_14 : f32 to vector<16x128xf32>
      %17 = arith.maximumf %15, %16 : vector<16x128xf32>
      %c0_15 = arith.constant 0 : index
      %c0_16 = arith.constant 0 : index
      %18 = vector.load %arg6[%c0_15, %c0_16] : memref<16x128xf32, #tpu.memory_space<vmem>>, vector<16x128xf32>
      tpu.vector_store %arg6[%c0_15, %c0_16], %17 {strides = array<i32>} : memref<16x128xf32, #tpu.memory_space<vmem>>, vector<16x128xf32>,
    } else {
    }
    return
  }
  func.func @transform_0(%arg0: i32, %arg1: i32, %arg2: i32) -> (i32, i32) {
    %c0_i32 = arith.constant 0 : i32
    return %arg0, %arg2 : i32, i32
  }
  func.func @transform_1(%arg0: i32, %arg1: i32, %arg2: i32) -> (i32, i32) {
    %c0_i32 = arith.constant 0 : i32
    return %arg2, %arg1 : i32, i32
  }
  func.func @transform_2(%arg0: i32, %arg1: i32, %arg2: i32) -> (i32, i32) {
    %c0_i32 = arith.constant 0 : i32
    %c0_i32_0 = arith.constant 0 : i32
    return %c0_i32, %arg1 : i32, i32
  }
  func.func @transform_3(%arg0: i32, %arg1: i32, %arg2: i32) -> (i32, i32) {
    %c0_i32 = arith.constant 0 : i32
    return %arg0, %arg1 : i32, i32
  }
}

module attributes {stable_mosaic.version = 11 : i64} {
  func.func @_dense_kernel(%arg0: i32, %arg1: i32, %arg2: i32, %arg3: memref<16x128xbf16, #tpu.memory_space<vmem>>, %arg4: memref<128x128xbf16, #tpu.memory_space<vmem>>, %arg5: memref<1x128xf32, #tpu.memory_space<vmem>>, %arg6: memref<16x128xf32, #tpu.memory_space<vmem>>, %arg7: memref<16x128xf32, #tpu.memory_space<vmem>>) attributes {dimension_semantics = [#tpu.dimension_semantics<parallel>, #tpu.dimension_semantics<parallel>, #tpu.dimension_semantics<arbitrary>], iteration_bounds = array<i64: 1, 1, 1>, scalar_prefetch = 0 : i64, scratch_operands = 1 : i64, tpu.core_type = #tpu.core_type<tc>, window_params = [{transform_indices = @transform_0, window_bounds = array<i64: 16, 128>}, {transform_indices = @transform_1, window_bounds = array<i64: 128, 128>}, {transform_indices = @transform_2, window_bounds = array<i64: 1, 128>}, {transform_indices = @transform_3, window_bounds = array<i64: 16, 128>}]} {
    %c0_i32 = arith.constant 0 : i32
    %0 = arith.cmpi eq, %arg2, %c0_i32 : i32
    %1 = arith.extui %0 : i1 to i32
    %c0_i32_0 = arith.constant 0 : i32
    %2 = arith.cmpi ne, %1, %c0_i32_0 : i32
    scf.if %2 {
      %cst_10 = arith.constant 0.000000e+00 : f32
      %12 = vector.broadcast %cst_10 : f32 to vector<16x128xf32>
      %c0_11 = arith.constant 0 : index
      %c0_12 = arith.constant 0 : index
      %13 = vector.load %arg7[%c0_11, %c0_12] : memref<16x128xf32, #tpu.memory_space<vmem>>, vector<16x128xf32>
      tpu.vector_store %arg7[%c0_11, %c0_12], %12 {strides = array<i32>} : memref<16x128xf32, #tpu.memory_space<vmem>>, vector<16x128xf32>,
    } else {
    }
    %c0 = arith.constant 0 : index
    %c0_1 = arith.constant 0 : index
    %3 = vector.load %arg7[%c0, %c0_1] : memref<16x128xf32, #tpu.memory_space<vmem>>, vector<16x128xf32>
    %c0_2 = arith.constant 0 : index
    %c0_3 = arith.constant 0 : index
    %4 = vector.load %arg3[%c0_2, %c0_3] : memref<16x128xbf16, #tpu.memory_space<vmem>>, vector<16x128xbf16>
    %c0_4 = arith.constant 0 : index
    %c0_5 = arith.constant 0 : index
    %5 = vector.load %arg4[%c0_4, %c0_5] : memref<128x128xbf16, #tpu.memory_space<vmem>>, vector<128x128xbf16>
    %cst = arith.constant dense<0.000000e+00> : vector<16x128xf32>
    %6 = tpu.matmul %4, %5, %cst {dimension_numbers = #tpu.dot_dimension_numbers<[1], [0], [0], [1], [0, 0, 1, 1], [], []>} : vector<16x128xbf16>, vector<128x128xbf16>, vector<16x128xf32> -> vector<16x128xf32>
    %7 = arith.addf %3, %6 : vector<16x128xf32>
    %c0_6 = arith.constant 0 : index
    %c0_7 = arith.constant 0 : index
    %8 = vector.load %arg7[%c0_6, %c0_7] : memref<16x128xf32, #tpu.memory_space<vmem>>, vector<16x128xf32>
    tpu.vector_store %arg7[%c0_6, %c0_7], %7 {strides = array<i32>} : memref<16x128xf32, #tpu.memory_space<vmem>>, vector<16x128xf32>,
    %c0_i32_8 = arith.constant 0 : i32
    %9 = arith.cmpi eq, %arg2, %c0_i32_8 : i32
    %10 = arith.extui %9 : i1 to i32
    %c0_i32_9 = arith.constant 0 : i32
    %11 = arith.cmpi ne, %10, %c0_i32_9 : i32
    scf.if %11 {
      %c0_10 = arith.constant 0 : index
      %c0_11 = arith.constant 0 : index
      %12 = vector.load %arg7[%c0_10, %c0_11] : memref<16x128xf32, #tpu.memory_space<vmem>>, vector<16x128xf32>
      %c0_12 = arith.constant 0 : index
      %c0_13 = arith.constant 0 : index
      %13 = vector.load %arg5[%c0_12, %c0_13] : memref<1x128xf32, #tpu.memory_space<vmem>>, vector<1x128xf32>
      %14 = vector.broadcast %13 : vector<1x128xf32> to vector<16x128xf32>
      %15 = arith.addf %12, %14 : vector<16x128xf32>
      %c128_i32 = arith.constant 128 : i32
      %16 = arith.muli %arg1, %c128_i32 : i32
      %17 = tpu.iota {dimensions = array<i32: 1>} : vector<16x128xi32>
      %18 = vector.broadcast %16 : i32 to vector<16x128xi32>
      %19 = arith.addi %18, %17 : vector<16x128xi32>
      %c19_i32 = arith.constant 19 : i32
      %20 = vector.broadcast %c19_i32 : i32 to vector<16x128xi32>
      %21 = arith.cmpi slt, %19, %20 : vector<16x128xi32>
      %cst_14 = arith.constant -1.000000e+09 : f32
      %22 = vector.broadcast %cst_14 : f32 to vector<16x128xf32>
      %23 = arith.select %21, %15, %22 : vector<16x128xi1>, vector<16x128xf32>
      %cst_15 = arith.constant dense<0xFF800000> : vector<16xf32>
      %24 = vector.multi_reduction <maximumf>, %23, %cst_15 [1] : vector<16x128xf32> to vector<16xf32>
      %25 = vector.shape_cast %24 : vector<16xf32> to vector<16x1xf32>
      %26 = vector.broadcast %25 : vector<16x1xf32> to vector<16x128xf32>
      %27 = arith.subf %23, %26 : vector<16x128xf32>
      %28 = math.exp %27 : vector<16x128xf32>
      %cst_16 = arith.constant dense<0.000000e+00> : vector<16xf32>
      %29 = vector.multi_reduction <add>, %28, %cst_16 [1] : vector<16x128xf32> to vector<16xf32>
      %30 = vector.shape_cast %29 : vector<16xf32> to vector<16x1xf32>
      %31 = vector.broadcast %30 : vector<16x1xf32> to vector<16x128xf32>
      %32 = arith.divf %28, %31 : vector<16x128xf32>
      %c0_17 = arith.constant 0 : index
      %c0_18 = arith.constant 0 : index
      %33 = vector.load %arg6[%c0_17, %c0_18] : memref<16x128xf32, #tpu.memory_space<vmem>>, vector<16x128xf32>
      tpu.vector_store %arg6[%c0_17, %c0_18], %32 {strides = array<i32>} : memref<16x128xf32, #tpu.memory_space<vmem>>, vector<16x128xf32>,
    } else {
    }
    return
  }
  func.func @transform_0(%arg0: i32, %arg1: i32, %arg2: i32) -> (i32, i32) {
    %c0_i32 = arith.constant 0 : i32
    return %arg0, %arg2 : i32, i32
  }
  func.func @transform_1(%arg0: i32, %arg1: i32, %arg2: i32) -> (i32, i32) {
    %c0_i32 = arith.constant 0 : i32
    return %arg2, %arg1 : i32, i32
  }
  func.func @transform_2(%arg0: i32, %arg1: i32, %arg2: i32) -> (i32, i32) {
    %c0_i32 = arith.constant 0 : i32
    %c0_i32_0 = arith.constant 0 : i32
    return %c0_i32, %arg1 : i32, i32
  }
  func.func @transform_3(%arg0: i32, %arg1: i32, %arg2: i32) -> (i32, i32) {
    %c0_i32 = arith.constant 0 : i32
    return %arg0, %arg1 : i32, i32
  }
}

</mosaic_0001>

<llo_original>
// kernel: transformer_forward.27
$region0: #{transformer_forward.27}
  #allocation0 [shape = 'u32[]', space=smem, size = 0x4, offset = 0x4, fixed_abs, tag = 'smem constant byte address 0x4 - core index']
  #allocation1 [shape = 'u32[144,128]{1,0:T(1,128)}', space=vmem, size = 0x12000, scoped, tag = 'internal scratch']
  #allocation2 [shape = 'f32[16,128]{1,0:T(8,128)}', space=vmem, size = 0x2000, scoped, tag = 'scratch operand']
  %s0 = inlined_call_operand.vmem [shape: bf16[16,128], index: 0, kind: input, shape index: {}]
  %s1 = inlined_call_operand.vmem [shape: bf16[128,128], index: 1, kind: input, shape index: {}]
  %s2 = inlined_call_operand.vmem [shape: f32[1,128], index: 2, kind: input, shape index: {}]
  %s3 = inlined_call_operand.vmem [shape: f32[16,128], index: 3, kind: output, shape index: {}]
  %s4 = sld [smem:[#allocation0]]
  $region30: #{transformer_forward.27} parent=0
    _
  %s6 = ssub.s32 1, %s4
  %s7 = scalar_select 0, %s6, %s4
  // Predicated region
  $region2: #{transformer_forward.27} parent=0 // pred_check
    _
  $region3: #{transformer_forward.27} parent=0 // pred_check_branch
    %9 = sbr.rel (0) target = $region5
  $region4: #{transformer_forward.27} parent=0 // pred_region
    _
  $region5: #{transformer_forward.27} parent=0 // pred_fallthru
    _
  // Predicated region
  $region6: #{transformer_forward.27} parent=0 // pred_check
    _
  $region7: #{transformer_forward.27} parent=0 // pred_check_branch
    %11 = sbr.rel (0) target = $region9
  $region8: #{transformer_forward.27} parent=0 // pred_region
    _
  $region9: #{transformer_forward.27} parent=0 // pred_fallthru
    _
  // Predicated region
  $region10: #{transformer_forward.27} parent=0 // pred_check
    _
  $region11: #{transformer_forward.27} parent=0 // pred_check_branch
    %13 = sbr.rel (0) target = $region13
  $region12: #{transformer_forward.27} parent=0 // pred_region
    _
  $region13: #{transformer_forward.27} parent=0 // pred_fallthru
    _
  %p15 = scmp.eq.s32.totalorder 0, 0
  // Predicated region
  $region14: #{transformer_forward.27} parent=0 // pred_check
    %p16 = pneg %p15
  $region15: #{transformer_forward.27} parent=0 // pred_check_branch
    %18 = sbr.rel (%p16) target = $region17
  $region16: #{transformer_forward.27} parent=0 // pred_region
    %19 = vst [vmem:[#allocation2] sm:$0xff] 0.0
    %20 = vst [vmem:[#allocation2 + $0x8] sm:$0xff] 0.0
  $region17: #{transformer_forward.27} parent=0 // pred_fallthru
    _
  %v21 = vld [vmem:[#allocation2] sm:$0xff]
  %v22 = vld [vmem:[#allocation2 + $0x8] sm:$0xff]
  %v23 = vld [vmem:[%s0] sm:$0xf]
  %v24 = vld [vmem:[%s0 + $0x4] sm:$0xf]
  %v25 = vld [vmem:[%s1] sm:$0xf]
  %v26 = vld [vmem:[%s1 + $0x4] sm:$0xf]
  %v27 = vld [vmem:[%s1 + $0x8] sm:$0xf]
  %v28 = vld [vmem:[%s1 + $0xc] sm:$0xf]
  %v29 = vld [vmem:[%s1 + $0x10] sm:$0xf]
  %v30 = vld [vmem:[%s1 + $0x14] sm:$0xf]
  %v31 = vld [vmem:[%s1 + $0x18] sm:$0xf]
  %v32 = vld [vmem:[%s1 + $0x1c] sm:$0xf]
  %v33 = vld [vmem:[%s1 + $0x20] sm:$0xf]
  %v34 = vld [vmem:[%s1 + $0x24] sm:$0xf]
  %v35 = vld [vmem:[%s1 + $0x28] sm:$0xf]
  %v36 = vld [vmem:[%s1 + $0x2c] sm:$0xf]
  %v37 = vld [vmem:[%s1 + $0x30] sm:$0xf]
  %v38 = vld [vmem:[%s1 + $0x34] sm:$0xf]
  %v39 = vld [vmem:[%s1 + $0x38] sm:$0xf]
  %v40 = vld [vmem:[%s1 + $0x3c] sm:$0xf]
  %v43 = vunpack.c.l.b16 %v23
  %v44 = vunpack.c.l.b16 %v24
  %v45 = vpack.c.b16 %v44, %v43
  %v63 = vunpack.c.l.b16 %v25
  %v64 = vunpack.c.l.b16 %v26
  %v65 = vunpack.c.l.b16 %v27
  %v66 = vunpack.c.l.b16 %v28
  %v67 = vunpack.c.l.b16 %v29
  %v68 = vunpack.c.l.b16 %v30
  %v69 = vunpack.c.l.b16 %v31
  %v70 = vunpack.c.l.b16 %v32
  %v71 = vunpack.c.l.b16 %v33
  %v72 = vunpack.c.l.b16 %v34
  %v73 = vunpack.c.l.b16 %v35
  %v74 = vunpack.c.l.b16 %v36
  %v75 = vunpack.c.l.b16 %v37
  %v76 = vunpack.c.l.b16 %v38
  %v77 = vunpack.c.l.b16 %v39
  %v78 = vunpack.c.l.b16 %v40
  %v79 = vpack.c.b16 %v64, %v63
  %v80 = vpack.c.b16 %v66, %v65
  %v81 = vpack.c.b16 %v68, %v67
  %v82 = vpack.c.b16 %v70, %v69
  %v83 = vpack.c.b16 %v72, %v71
  %v84 = vpack.c.b16 %v74, %v73
  %v85 = vpack.c.b16 %v76, %v75
  %v86 = vpack.c.b16 %v78, %v77
  %95 = vmatprep.subr.bf16.mxu0 0
  %96 = vmatpush1.bf16.msra.mxu0 %v79
  %97 = vmatprep.subr.bf16.mxu0 0
  %98 = vmatpush1.bf16.msra.mxu0 %v80
  %99 = vmatprep.subr.bf16.mxu0 0
  %100 = vmatpush1.bf16.msra.mxu0 %v81
  %101 = vmatprep.subr.bf16.mxu0 0
  %102 = vmatpush1.bf16.msra.mxu0 %v82
  %103 = vmatprep.subr.bf16.mxu0 0
  %104 = vmatpush1.bf16.msra.mxu0 %v83
  %105 = vmatprep.subr.bf16.mxu0 0
  %106 = vmatpush1.bf16.msra.mxu0 %v84
  %107 = vmatprep.subr.bf16.mxu0 0
  %108 = vmatpush1.bf16.msra.mxu0 %v85
  %109 = vmatprep.subr.bf16.mxu0 0
  %110 = vmatpush1.bf16.msra.mxu0 %v86
  %111 = vmatprep.subr.bf16.mxu0 0
  %112 = vmatpush1.bf16.msra.mxu0 0
  %113 = vmatprep.subr.bf16.mxu0 0
  %114 = vmatpush1.bf16.msra.mxu0 0
  %115 = vmatprep.subr.bf16.mxu0 0
  %116 = vmatpush1.bf16.msra.mxu0 0
  %117 = vmatprep.subr.bf16.mxu0 0
  %118 = vmatpush1.bf16.msra.mxu0 0
  %119 = vmatprep.subr.bf16.mxu0 0
  %120 = vmatpush1.bf16.msra.mxu0 0
  %121 = vmatprep.subr.bf16.mxu0 0
  %122 = vmatpush1.bf16.msra.mxu0 0
  %123 = vmatprep.subr.bf16.mxu0 0
  %124 = vmatpush1.bf16.msra.mxu0 0
  %125 = vmatprep.subr.bf16.mxu0 0
  %126 = vmatpush1.bf16.msra.mxu0 0
  %127 = vmatprep.mubr.bf16.mxu0 0
  %128 = vmatmul.mubr.bf16.gmra.mrb[0].mxu0 %v45
  %v129 = vpop.f32.mrb[0].mxu0
  %v130 = vadd.f32 0.0, %v129
  %v131 = vpop.f32.mrb[0].mxu0
  %v132 = vpop.f32.mrb[0].mxu0
  %v133 = vadd.f32 0.0, %v132
  %v134 = vpop.f32.mrb[0].mxu0
  %135 = vdwg.mxu0
  %v136 = vadd.f32 %v21, %v130
  %v137 = vadd.f32 %v22, %v133
  %138 = vst [vmem:[#allocation2] sm:$0xff] %v136
  %139 = vst [vmem:[#allocation2 + $0x8] sm:$0xff] %v137
  // Predicated region
  $region18: #{transformer_forward.27} parent=0 // pred_check
    %p140 = pneg %p15
  $region19: #{transformer_forward.27} parent=0 // pred_check_branch
    %142 = sbr.rel (%p140) target = $region21
  $region20: #{transformer_forward.27} parent=0 // pred_region
    %v143 = vld [vmem:[#allocation2] sm:$0xff]
    %v144 = vld [vmem:[#allocation2 + $0x8] sm:$0xff]
    %v145 = vld [vmem:[%s2] sm:$0x1]
    %v147 = vlaneseq
    %v148 = vshrl.u32 %v147, 7
    %v149 = vsub.s32 0, %v148
    %v150 = vrot.slane %v145, %v149
    %v152 = vadd.f32 %v143, %v150
    %v153 = vadd.f32 %v144, %v150
    %154 = vst [vmem:[%s3] sm:$0xff] %v152
    %155 = vst [vmem:[%s3 + $0x8] sm:$0xff] %v153
  $region21: #{transformer_forward.27} parent=0 // pred_fallthru
    _
  // Predicated region
  $region22: #{transformer_forward.27} parent=0 // pred_check
    _
  $region23: #{transformer_forward.27} parent=0 // pred_check_branch
    %157 = sbr.rel (0) target = $region25
  $region24: #{transformer_forward.27} parent=0 // pred_region
    _
  $region25: #{transformer_forward.27} parent=0 // pred_fallthru
    _
  // Predicated region
  $region26: #{transformer_forward.27} parent=0 // pred_check
    _
  $region27: #{transformer_forward.27} parent=0 // pred_check_branch
    %159 = sbr.rel (0) target = $region29
  $region28: #{transformer_forward.27} parent=0 // pred_region
    _
  $region29: #{transformer_forward.27} parent=0 // pred_fallthru
    _

// kernel: transformer_forward.28
$region0: #{transformer_forward.28}
  #allocation0 [shape = 'u32[]', space=smem, size = 0x4, offset = 0x4, fixed_abs, tag = 'smem constant byte address 0x4 - core index']
  #allocation1 [shape = 'u32[144,128]{1,0:T(1,128)}', space=vmem, size = 0x12000, scoped, tag = 'internal scratch']
  #allocation2 [shape = 'f32[8,1]{1,0:T(8,128)}', space=vmem, size = 0x1000, scoped, tag = 'scratch operand']
  #allocation3 [shape = 'f32[8,1]{1,0:T(8,128)}', space=vmem, size = 0x1000, scoped, tag = 'scratch operand']
  #allocation4 [shape = 'f32[8,8]{1,0:T(8,128)}', space=vmem, size = 0x1000, scoped, tag = 'scratch operand']
  %s0 = inlined_call_operand.vmem [shape: bf16[2,4,8,8], index: 0, kind: input, shape index: {}]
  %s1 = inlined_call_operand.vmem [shape: bf16[2,4,8,8], index: 1, kind: input, shape index: {}]
  %s2 = inlined_call_operand.vmem [shape: bf16[2,4,8,8], index: 2, kind: input, shape index: {}]
  %s3 = inlined_call_operand.vmem [shape: f32[2,4,8,8], index: 3, kind: output, shape index: {}]
  %s4 = sld [smem:[#allocation0]]
  $region53: #{transformer_forward.28} parent=0
    _
  %s6 = ssub.s32 1, %s4
  %s7 = scalar_select 0, %s6, %s4
  loop: start=0, step=1, limit=10
  $region2: #{transformer_forward.28} parent=0 // loop_pre_header
    _
  $region3: #{transformer_forward.28} parent=0 // loop_header
    %s9 = sphi 0, %s13
    %p10 = scmp.ge.s32.totalorder %s9, 10
    %s16 = sphi 0, %s42
    %s17 = sphi 0, %s38
    %s18 = sphi 0, %s34
    %s19 = sphi 0, %s30
    %s20 = sphi 0, %s16
    %s21 = sphi 0, %s17
    %s22 = sphi 0, %s18
    %s23 = sphi 0, %s19
    %s24 = sphi 0, %s20
    %s25 = sphi 0, %s21
    %s26 = sphi 0, %s22
    %s27 = sphi 0, %s23
    %s49 = sphi 0, %s51
    %s52 = sphi 0, %s49
    %s53 = sphi 0, %s52
    %s69 = sphi 0, %s53
    %s79 = sphi 0, %s81
    %s82 = sphi 0, %s79
    %s83 = sphi 0, %s82
    %s99 = sphi 0, %s83
    %s109 = sphi 0, %s111
    %s112 = sphi 0, %s109
    %s113 = sphi 0, %s112
    %s129 = sphi 0, %s113
    %s139 = sphi 0, %s141
    %s142 = sphi 0, %s139
    %s143 = sphi 0, %s142
    %s159 = sphi 0, %s143
  $region4: #{transformer_forward.28} parent=0 // loop_header_branch
    %12 = sbr.rel (%p10) target = $region8
  $region5: #{transformer_forward.28} parent=0 // loop_body
    %s14 = ssub.s32 %s9, 1
    %s15 = ssub.s32 %s9, 2
    %s28 = sadd.s32 1, %s19
    %p29 = scmp.ge.s32.totalorder %s28, 1
    %s30 = scalar_select %p29, 0, %s28
    %s31 = sadd.s32 1, %s18
    %s32 = scalar_select %p29, %s31, %s18
    %p33 = scmp.ge.s32.totalorder %s32, 1
    %s34 = scalar_select %p33, 0, %s32
    %s35 = sadd.s32 1, %s17
    %s36 = scalar_select %p33, %s35, %s17
    %p37 = scmp.ge.s32.totalorder %s36, 4
    %s38 = scalar_select %p37, 0, %s36
    %s39 = sadd.s32 1, %s16
    %s40 = scalar_select %p37, %s39, %s16
    %p41 = scmp.ge.s32.totalorder %s40, 2
    %s42 = scalar_select %p41, 0, %s40
    %s43 = ssub.s32 %s16, %s42
    %s44 = ssub.s32 %s17, %s38
    %s45 = sor.u32 %s43, %s44
    %s46 = ssub.s32 %s18, %s34
    %s47 = sor.u32 %s45, %s46
    %p48 = scmp.eq.s32.totalorder %s47, 0
    %s50 = sadd.s32 %s49, 1
    %s51 = scalar_select %p48, %s49, %s50
    %p54 = pneg %p48
    %p55 = scmp.eq.s32.totalorder %s9, 7
    %p56 = por %p54, %p55
    %p57 = scmp.ne.s32.totalorder %s49, %s52
    %p58 = scmp.eq.s32.totalorder %s9, 0
    %p59 = por %p57, %p58
    %p60 = scmp.ne.s32.totalorder %s49, %s52
    %p61 = scmp.eq.s32.totalorder %s14, 7
    %p62 = por %p60, %p61
    %p63 = scmp.ne.s32.totalorder %s52, %s53
    %p64 = scmp.eq.s32.totalorder %s14, 0
    %p65 = por %p63, %p64
    %p66 = scmp.ne.s32.totalorder %s52, %s53
    %p67 = scmp.eq.s32.totalorder %s15, 7
    %p68 = por %p66, %p67
    %p70 = scmp.ne.s32.totalorder %s53, %s69
    %p71 = scmp.eq.s32.totalorder %s15, 0
    %p72 = por %p70, %p71
    %s73 = ssub.s32 %s16, %s42
    %s74 = ssub.s32 %s17, %s38
    %s75 = sor.u32 %s73, %s74
    %s76 = ssub.s32 %s19, %s30
    %s77 = sor.u32 %s75, %s76
    %p78 = scmp.eq.s32.totalorder %s77, 0
    %s80 = sadd.s32 %s79, 1
    %s81 = scalar_select %p78, %s79, %s80
    %p84 = pneg %p78
    %p85 = scmp.eq.s32.totalorder %s9, 7
    %p86 = por %p84, %p85
    %p87 = scmp.ne.s32.totalorder %s79, %s82
    %p88 = scmp.eq.s32.totalorder %s9, 0
    %p89 = por %p87, %p88
    %p90 = scmp.ne.s32.totalorder %s79, %s82
    %p91 = scmp.eq.s32.totalorder %s14, 7
    %p92 = por %p90, %p91
    %p93 = scmp.ne.s32.totalorder %s82, %s83
    %p94 = scmp.eq.s32.totalorder %s14, 0
    %p95 = por %p93, %p94
    %p96 = scmp.ne.s32.totalorder %s82, %s83
    %p97 = scmp.eq.s32.totalorder %s15, 7
    %p98 = por %p96, %p97
    %p100 = scmp.ne.s32.totalorder %s83, %s99
    %p101 = scmp.eq.s32.totalorder %s15, 0
    %p102 = por %p100, %p101
    %s103 = ssub.s32 %s16, %s42
    %s104 = ssub.s32 %s17, %s38
    %s105 = sor.u32 %s103, %s104
    %s106 = ssub.s32 %s19, %s30
    %s107 = sor.u32 %s105, %s106
    %p108 = scmp.eq.s32.totalorder %s107, 0
    %s110 = sadd.s32 %s109, 1
    %s111 = scalar_select %p108, %s109, %s110
    %p114 = pneg %p108
    %p115 = scmp.eq.s32.totalorder %s9, 7
    %p116 = por %p114, %p115
    %p117 = scmp.ne.s32.totalorder %s109, %s112
    %p118 = scmp.eq.s32.totalorder %s9, 0
    %p119 = por %p117, %p118
    %p120 = scmp.ne.s32.totalorder %s109, %s112
    %p121 = scmp.eq.s32.totalorder %s14, 7
    %p122 = por %p120, %p121
    %p123 = scmp.ne.s32.totalorder %s112, %s113
    %p124 = scmp.eq.s32.totalorder %s14, 0
    %p125 = por %p123, %p124
    %p126 = scmp.ne.s32.totalorder %s112, %s113
    %p127 = scmp.eq.s32.totalorder %s15, 7
    %p128 = por %p126, %p127
    %p130 = scmp.ne.s32.totalorder %s113, %s129
    %p131 = scmp.eq.s32.totalorder %s15, 0
    %p132 = por %p130, %p131
    %s133 = ssub.s32 %s16, %s42
    %s134 = ssub.s32 %s17, %s38
    %s135 = sor.u32 %s133, %s134
    %s136 = ssub.s32 %s18, %s34
    %s137 = sor.u32 %s135, %s136
    %p138 = scmp.eq.s32.totalorder %s137, 0
    %s140 = sadd.s32 %s139, 1
    %s141 = scalar_select %p138, %s139, %s140
    %p144 = pneg %p138
    %p145 = scmp.eq.s32.totalorder %s9, 7
    %p146 = por %p144, %p145
    %p147 = scmp.ne.s32.totalorder %s139, %s142
    %p148 = scmp.eq.s32.totalorder %s9, 0
    %p149 = por %p147, %p148
    %p150 = scmp.ne.s32.totalorder %s139, %s142
    %p151 = scmp.eq.s32.totalorder %s14, 7
    %p152 = por %p150, %p151
    %p153 = scmp.ne.s32.totalorder %s142, %s143
    %p154 = scmp.eq.s32.totalorder %s14, 0
    %p155 = por %p153, %p154
    %p156 = scmp.ne.s32.totalorder %s142, %s143
    %p157 = scmp.eq.s32.totalorder %s15, 7
    %p158 = por %p156, %p157
    %p160 = scmp.ne.s32.totalorder %s143, %s159
    %p161 = scmp.eq.s32.totalorder %s15, 0
    %p162 = por %p160, %p161
    %p163 = scmp.le.s32.totalorder 1, %s9
    %p164 = scmp.lt.s32.totalorder %s9, 9
    %p165 = pnand %p163, %p164
    %p166 = pneg %p165
    // Predicated region
    $region9: #{transformer_forward.28} parent=5 // pred_check
      _
    $region10: #{transformer_forward.28} parent=5 // pred_check_branch
      %168 = sbr.rel (%p165) target = $region12
    $region11: #{transformer_forward.28} parent=5 // pred_region
      %s169 = ssub.s32 %s9, 1
    $region12: #{transformer_forward.28} parent=5 // pred_fallthru
      _
    %p170 = scmp.lt.s32.totalorder %s9, 8
    // Predicated region
    $region13: #{transformer_forward.28} parent=5 // pred_check
      %p171 = pneg %p170
    $region14: #{transformer_forward.28} parent=5 // pred_check_branch
      %173 = sbr.rel (%p171) target = $region16
    $region15: #{transformer_forward.28} parent=5 // pred_region
      // Predicated region
      $region17: #{transformer_forward.28} parent=15 // pred_check
        %p174 = pneg %p59
      $region18: #{transformer_forward.28} parent=15 // pred_check_branch
        %176 = sbr.rel (%p174) target = $region20
      $region19: #{transformer_forward.28} parent=15 // pred_region
        %p177 = scmp.lt.s32.totalorder %s16, 1
        %s178 = scalar_select %p177, %s16, 1
        %p179 = scmp.lt.s32.totalorder %s17, 3
        %s180 = scalar_select %p179, %s17, 3
        %p181 = scmp.lt.s32.totalorder %s18, 0
        %s182 = scalar_select %p181, %s18, 0
        %s183 = sadd.s32 %s182, %s180
        %s184 = smul.addr %s178, 4
        %s185 = sadd.s32 %s183, %s184
        %s186 = smul.addr %s185, 4
        %s187 = scalar_lea.vmem %s0, %s186
      $region20: #{transformer_forward.28} parent=15 // pred_fallthru
        _
      // Predicated region
      $region21: #{transformer_forward.28} parent=15 // pred_check
        %p188 = pneg %p89
      $region22: #{transformer_forward.28} parent=15 // pred_check_branch
        %190 = sbr.rel (%p188) target = $region24
      $region23: #{transformer_forward.28} parent=15 // pred_region
        %p191 = scmp.lt.s32.totalorder %s16, 1
        %s192 = scalar_select %p191, %s16, 1
        %p193 = scmp.lt.s32.totalorder %s17, 3
        %s194 = scalar_select %p193, %s17, 3
        %p195 = scmp.lt.s32.totalorder %s19, 0
        %s196 = scalar_select %p195, %s19, 0
        %s197 = sadd.s32 %s196, %s194
        %s198 = smul.addr %s192, 4
        %s199 = sadd.s32 %s197, %s198
        %s200 = smul.addr %s199, 4
        %s201 = scalar_lea.vmem %s1, %s200
      $region24: #{transformer_forward.28} parent=15 // pred_fallthru
        _
      // Predicated region
      $region25: #{transformer_forward.28} parent=15 // pred_check
        %p202 = pneg %p119
      $region26: #{transformer_forward.28} parent=15 // pred_check_branch
        %204 = sbr.rel (%p202) target = $region28
      $region27: #{transformer_forward.28} parent=15 // pred_region
        %p205 = scmp.lt.s32.totalorder %s16, 1
        %s206 = scalar_select %p205, %s16, 1
        %p207 = scmp.lt.s32.totalorder %s17, 3
        %s208 = scalar_select %p207, %s17, 3
        %p209 = scmp.lt.s32.totalorder %s19, 0
        %s210 = scalar_select %p209, %s19, 0
        %s211 = sadd.s32 %s210, %s208
        %s212 = smul.addr %s206, 4
        %s213 = sadd.s32 %s211, %s212
        %s214 = smul.addr %s213, 4
        %s215 = scalar_lea.vmem %s2, %s214
      $region28: #{transformer_forward.28} parent=15 // pred_fallthru
        _
    $region16: #{transformer_forward.28} parent=5 // pred_fallthru
      _
    %p216 = scmp.le.s32.totalorder 1, %s9
    %p217 = scmp.lt.s32.totalorder %s9, 9
    %p218 = pnand %p216, %p217
    %p219 = pneg %p218
    // Predicated region
    $region29: #{transformer_forward.28} parent=5 // pred_check
      _
    $region30: #{transformer_forward.28} parent=5 // pred_check_branch
      %221 = sbr.rel (%p218) target = $region32
    $region31: #{transformer_forward.28} parent=5 // pred_region
      %s222 = ssub.s32 %s9, 1
      %p223 = scmp.lt.s32.totalorder %s20, 1
      %s224 = scalar_select %p223, %s20, 1
      %p225 = scmp.lt.s32.totalorder %s21, 3
      %s226 = scalar_select %p225, %s21, 3
      %p227 = scmp.lt.s32.totalorder %s22, 0
      %s228 = scalar_select %p227, %s22, 0
      %s229 = sadd.s32 %s228, %s226
      %s230 = smul.addr %s224, 4
      %s231 = sadd.s32 %s229, %s230
      %s232 = smul.addr %s231, 4
      %s233 = scalar_lea.vmem %s0, %s232
      %p234 = pneg %p65
      %p235 = pneg %p62
      %p236 = scmp.lt.s32.totalorder %s20, 1
      %s237 = scalar_select %p236, %s20, 1
      %p238 = scmp.lt.s32.totalorder %s21, 3
      %s239 = scalar_select %p238, %s21, 3
      %p240 = scmp.lt.s32.totalorder %s23, 0
      %s241 = scalar_select %p240, %s23, 0
      %s242 = sadd.s32 %s241, %s239
      %s243 = smul.addr %s237, 4
      %s244 = sadd.s32 %s242, %s243
      %s245 = smul.addr %s244, 4
      %s246 = scalar_lea.vmem %s1, %s245
      %p247 = pneg %p95
      %p248 = pneg %p92
      %p249 = scmp.lt.s32.totalorder %s20, 1
      %s250 = scalar_select %p249, %s20, 1
      %p251 = scmp.lt.s32.totalorder %s21, 3
      %s252 = scalar_select %p251, %s21, 3
      %p253 = scmp.lt.s32.totalorder %s23, 0
      %s254 = scalar_select %p253, %s23, 0
      %s255 = sadd.s32 %s254, %s252
      %s256 = smul.addr %s250, 4
      %s257 = sadd.s32 %s255, %s256
      %s258 = smul.addr %s257, 4
      %s259 = scalar_lea.vmem %s2, %s258
      %p260 = pneg %p125
      %p261 = pneg %p122
      %p262 = pneg %p155
      %p263 = pneg %p152
      %p264 = scmp.lt.s32.totalorder %s20, 1
      %s265 = scalar_select %p264, %s20, 1
      %p266 = scmp.lt.s32.totalorder %s21, 3
      %s267 = scalar_select %p266, %s21, 3
      %p268 = scmp.lt.s32.totalorder %s22, 0
      %s269 = scalar_select %p268, %s22, 0
      %s270 = sadd.s32 %s269, %s267
      %s271 = smul.addr %s265, 4
      %s272 = sadd.s32 %s270, %s271
      %s273 = smul.addr %s272, 8
      %s274 = scalar_lea.vmem %s3, %s273
      %p275 = scmp.lt.s32.totalorder %s20, 1
      %s276 = scalar_select %p275, %s20, 1
      %p277 = scmp.lt.s32.totalorder %s21, 3
      %s278 = scalar_select %p277, %s21, 3
      %p279 = scmp.lt.s32.totalorder %s22, 0
      %s280 = scalar_select %p279, %s22, 0
      %s281 = sadd.s32 %s280, %s278
      %s282 = smul.addr %s276, 4
      %s283 = sadd.s32 %s281, %s282
      %s284 = smul.addr %s283, 4
      %s285 = scalar_lea.vmem %s0, %s284
      %p286 = scmp.lt.s32.totalorder %s20, 1
      %s287 = scalar_select %p286, %s20, 1
      %p288 = scmp.lt.s32.totalorder %s21, 3
      %s289 = scalar_select %p288, %s21, 3
      %p290 = scmp.lt.s32.totalorder %s23, 0
      %s291 = scalar_select %p290, %s23, 0
      %s292 = sadd.s32 %s291, %s289
      %s293 = smul.addr %s287, 4
      %s294 = sadd.s32 %s292, %s293
      %s295 = smul.addr %s294, 4
      %s296 = scalar_lea.vmem %s1, %s295
      %p297 = scmp.lt.s32.totalorder %s20, 1
      %s298 = scalar_select %p297, %s20, 1
      %p299 = scmp.lt.s32.totalorder %s21, 3
      %s300 = scalar_select %p299, %s21, 3
      %p301 = scmp.lt.s32.totalorder %s23, 0
      %s302 = scalar_select %p301, %s23, 0
      %s303 = sadd.s32 %s302, %s300
      %s304 = smul.addr %s298, 4
      %s305 = sadd.s32 %s303, %s304
      %s306 = smul.addr %s305, 4
      %s307 = scalar_lea.vmem %s2, %s306
      %p308 = scmp.lt.s32.totalorder %s20, 1
      %s309 = scalar_select %p308, %s20, 1
      %p310 = scmp.lt.s32.totalorder %s21, 3
      %s311 = scalar_select %p310, %s21, 3
      %p312 = scmp.lt.s32.totalorder %s22, 0
      %s313 = scalar_select %p312, %s22, 0
      %s314 = sadd.s32 %s313, %s311
      %s315 = smul.addr %s309, 4
      %s316 = sadd.s32 %s314, %s315
      %s317 = smul.addr %s316, 8
      %s318 = scalar_lea.vmem %s3, %s317
      %p320 = scmp.eq.s32.totalorder %s23, 0
      // Predicated region
      $region33: #{transformer_forward.28} parent=31 // pred_check
        %p321 = pneg %p320
      $region34: #{transformer_forward.28} parent=31 // pred_check_branch
        %323 = sbr.rel (%p321) target = $region36
      $region35: #{transformer_forward.28} parent=31 // pred_region
        %vm324 = vcmask 7168
        %325 = vst.msk [vmem:[#allocation2] sm:$0xff] %vm324, -inf
        %326 = vst.msk [vmem:[#allocation3] sm:$0xff] %vm324, 0.0
        %vm327 = vcmask 64512
        %328 = vst.msk [vmem:[#allocation4] sm:$0xff] %vm327, 0.0
      $region36: #{transformer_forward.28} parent=31 // pred_fallthru
        _
      %v329 = vld [vmem:[%s285] sm:$0xf]
      %v330 = vld [vmem:[%s296] sm:$0xf]
      %v331 = vld [vmem:[%s307] sm:$0xf]
      %vm332 = vcmask 64512
      %v334 = vsel %vm332, %v329, 0
      %v337 = vsel %vm332, %v330, 0
      %339 = vmatprep.subr.bf16.mxu0 0
      %340 = vmatpush1.bf16.xpose.msra.mxu0 %v337
      %341 = vmatprep.subr.bf16.mxu0 0
      %342 = vmatpush1.bf16.xpose.msra.mxu0 0
      %343 = vmatprep.subr.bf16.mxu0 0
      %344 = vmatpush1.bf16.xpose.msra.mxu0 0
      %345 = vmatprep.subr.bf16.mxu0 0
      %346 = vmatpush1.bf16.xpose.msra.mxu0 0
      %347 = vmatprep.subr.bf16.mxu0 0
      %348 = vmatpush1.bf16.xpose.msra.mxu0 0
      %349 = vmatprep.subr.bf16.mxu0 0
      %350 = vmatpush1.bf16.xpose.msra.mxu0 0
      %351 = vmatprep.subr.bf16.mxu0 0
      %352 = vmatpush1.bf16.xpose.msra.mxu0 0
      %353 = vmatprep.subr.bf16.mxu0 0
      %354 = vmatpush1.bf16.xpose.msra.mxu0 0
      %355 = vmatprep.subr.bf16.mxu0 0
      %356 = vmatpush1.bf16.xpose.msra.mxu0 0
      %357 = vmatprep.subr.bf16.mxu0 0
      %358 = vmatpush1.bf16.xpose.msra.mxu0 0
      %359 = vmatprep.subr.bf16.mxu0 0
      %360 = vmatpush1.bf16.xpose.msra.mxu0 0
      %361 = vmatprep.subr.bf16.mxu0 0
      %362 = vmatpush1.bf16.xpose.msra.mxu0 0
      %363 = vmatprep.subr.bf16.mxu0 0
      %364 = vmatpush1.bf16.xpose.msra.mxu0 0
      %365 = vmatprep.subr.bf16.mxu0 0
      %366 = vmatpush1.bf16.xpose.msra.mxu0 0
      %367 = vmatprep.subr.bf16.mxu0 0
      %368 = vmatpush1.bf16.xpose.msra.mxu0 0
      %369 = vmatprep.subr.bf16.mxu0 0
      %370 = vmatpush1.bf16.xpose.msra.mxu0 0
      %371 = vmatprep.mubr.bf16.mxu0 0
      %372 = vmatmul.mubr.bf16.gmra.mrb[0].mxu0 %v334
      %v373 = vpop.f32.mrb[0].mxu0
      %v374 = vadd.f32 0.0, %v373
      %v375 = vpop.f32.mrb[0].mxu0
      %v376 = vpop.f32.mrb[0].mxu0
      %v377 = vpop.f32.mrb[0].mxu0
      %378 = vdwg.mxu0
      %v379 = vmul.f32 %v374, 0.35355338
      %s380 = smul.u32 %s22, 8
      %v381 = vlaneseq
      %v382 = vshrl.u32 %v381, 7
      %v383 = vstv %s380
      %v384 = vadd.s32 %v383, %v382
      %s385 = smul.u32 %s23, 8
      %v386 = vlaneseq
      %v387 = vand.u32 %v386, 127
      %v388 = vstv %s385
      %v389 = vadd.s32 %v388, %v387
      %vm390 = vcmp.gt.s32.totalorder %v389, %v384
      %v391 = vsel %vm390, -1e+09, 0.0
      %v392 = vadd.f32 %v379, %v391
      %v393 = vld [vmem:[#allocation2] sm:$0xff]
      %v394 = vsel %vm332, %v392, -inf
      %395 = vmax.xlane.f32.xlu0 %v394
      %v396 = vpop.xlane.xlu0 %395
      %v397 = vmax.f32 %v393, %v396
      %v398 = vsub.f32 %v393, %v397
      %v399 = vmul.f32 %v398, 1.442695
      %v400 = vpow.pop %v399
      %402 = vset.pattern.permute.xlu0 0
      %403 = vperm.xlu0 %402, %v397
      %v404 = vpop.permute.xlu0 %403
      %v406 = vsub.f32 %v392, %v404
      %v407 = vmul.f32 %v406, 1.442695
      %v408 = vpow.pop %v407
      %v409 = vld [vmem:[#allocation3] sm:$0xff]
      %v410 = vmul.f32 %v400, %v409
      %v411 = vsel %vm332, %v408, 0.0
      %412 = vadd.xlane.f32.xlu0 %v411
      %v413 = vpop.xlane.xlu0 %412
      %v414 = vadd.f32 %v410, %v413
      %vm415 = vcmask 7168
      %416 = vst.msk [vmem:[#allocation3] sm:$0xff] %vm415, %v414
      %v417 = vld [vmem:[#allocation4] sm:$0xff]
      %419 = vset.pattern.permute.xlu0 0
      %420 = vperm.xlu0 %419, %v400
      %v421 = vpop.permute.xlu0 %420
      %v423 = vmul.f32 %v421, %v417
      %v424 = vpack.c.bf16 %v408, %v408
      %v426 = vsel %vm332, %v424, 0
      %vm428 = vcmask 1043456
      %v430 = vsel %vm428, %v331, 0
      %432 = vmatprep.subr.bf16.mxu0 0
      %433 = vmatpush1.bf16.msra.mxu0 %v430
      %434 = vmatprep.subr.bf16.mxu0 0
      %435 = vmatpush1.bf16.msra.mxu0 0
      %436 = vmatprep.subr.bf16.mxu0 0
      %437 = vmatpush1.bf16.msra.mxu0 0
      %438 = vmatprep.subr.bf16.mxu0 0
      %439 = vmatpush1.bf16.msra.mxu0 0
      %440 = vmatprep.subr.bf16.mxu0 0
      %441 = vmatpush1.bf16.msra.mxu0 0
      %442 = vmatprep.subr.bf16.mxu0 0
      %443 = vmatpush1.bf16.msra.mxu0 0
      %444 = vmatprep.subr.bf16.mxu0 0
      %445 = vmatpush1.bf16.msra.mxu0 0
      %446 = vmatprep.subr.bf16.mxu0 0
      %447 = vmatpush1.bf16.msra.mxu0 0
      %448 = vmatprep.subr.bf16.mxu0 0
      %449 = vmatpush1.bf16.msra.mxu0 0
      %450 = vmatprep.subr.bf16.mxu0 0
      %451 = vmatpush1.bf16.msra.mxu0 0
      %452 = vmatprep.subr.bf16.mxu0 0
      %453 = vmatpush1.bf16.msra.mxu0 0
      %454 = vmatprep.subr.bf16.mxu0 0
      %455 = vmatpush1.bf16.msra.mxu0 0
      %456 = vmatprep.subr.bf16.mxu0 0
      %457 = vmatpush1.bf16.msra.mxu0 0
      %458 = vmatprep.subr.bf16.mxu0 0
      %459 = vmatpush1.bf16.msra.mxu0 0
      %460 = vmatprep.subr.bf16.mxu0 0
      %461 = vmatpush1.bf16.msra.mxu0 0
      %462 = vmatprep.subr.bf16.mxu0 0
      %463 = vmatpush1.bf16.msra.mxu0 0
      %464 = vmatprep.mubr.bf16.mxu0 0
      %465 = vmatmul.mubr.bf16.gmra.mrb[0].mxu0 %v426
      %v466 = vpop.f32.mrb[0].mxu0
      %v467 = vadd.f32 0.0, %v466
      %v468 = vpop.f32.mrb[0].mxu0
      %v469 = vpop.f32.mrb[0].mxu0
      %v470 = vpop.f32.mrb[0].mxu0
      %471 = vdwg.mxu0
      %v472 = vadd.f32 %v423, %v467
      %473 = vst.msk [vmem:[#allocation4] sm:$0xff] %vm332, %v472
      %474 = vst.msk [vmem:[#allocation2] sm:$0xff] %vm415, %v397
      // Predicated region
      $region37: #{transformer_forward.28} parent=31 // pred_check
        %p475 = pneg %p320
      $region38: #{transformer_forward.28} parent=31 // pred_check_branch
        %477 = sbr.rel (%p475) target = $region40
      $region39: #{transformer_forward.28} parent=31 // pred_region
        %v478 = vld [vmem:[#allocation4] sm:$0xff]
        %v479 = vld [vmem:[#allocation3] sm:$0xff]
        %481 = vset.pattern.permute.xlu0 0
        %482 = vperm.xlu0 %481, %v479
        %v483 = vpop.permute.xlu0 %482
        %v485 = vrcp.pop %v483
        %v486 = vmul.f32 %v478, %v485
        %487 = vst.msk [vmem:[%s318] sm:$0xff] %vm332, %v486
      $region40: #{transformer_forward.28} parent=31 // pred_fallthru
        _
      %p488 = scmp.lt.s32.totalorder %s20, 1
      %s489 = scalar_select %p488, %s20, 1
      %p490 = scmp.lt.s32.totalorder %s21, 3
      %s491 = scalar_select %p490, %s21, 3
      %p492 = scmp.lt.s32.totalorder %s22, 0
      %s493 = scalar_select %p492, %s22, 0
      %s494 = sadd.s32 %s493, %s491
      %s495 = smul.addr %s489, 4
      %s496 = sadd.s32 %s494, %s495
      %s497 = smul.addr %s496, 8
      %s498 = scalar_lea.vmem %s3, %s497
      // Predicated region
      $region41: #{transformer_forward.28} parent=31 // pred_check
        %p499 = pneg %p152
      $region42: #{transformer_forward.28} parent=31 // pred_check_branch
        %501 = sbr.rel (%p499) target = $region44
      $region43: #{transformer_forward.28} parent=31 // pred_region
        _
      $region44: #{transformer_forward.28} parent=31 // pred_fallthru
        _
    $region32: #{transformer_forward.28} parent=5 // pred_fallthru
      _
    %p502 = scmp.le.s32.totalorder 2, %s9
    // Predicated region
    $region45: #{transformer_forward.28} parent=5 // pred_check
      %p503 = pneg %p502
    $region46: #{transformer_forward.28} parent=5 // pred_check_branch
      %505 = sbr.rel (%p503) target = $region48
    $region47: #{transformer_forward.28} parent=5 // pred_region
      %s506 = ssub.s32 %s9, 2
      // Predicated region
      $region49: #{transformer_forward.28} parent=47 // pred_check
        %p507 = pneg %p158
      $region50: #{transformer_forward.28} parent=47 // pred_check_branch
        %509 = sbr.rel (%p507) target = $region52
      $region51: #{transformer_forward.28} parent=47 // pred_region
        %p510 = scmp.lt.s32.totalorder %s24, 1
        %s511 = scalar_select %p510, %s24, 1
        %p512 = scmp.lt.s32.totalorder %s25, 3
        %s513 = scalar_select %p512, %s25, 3
        %p514 = scmp.lt.s32.totalorder %s26, 0
        %s515 = scalar_select %p514, %s26, 0
        %s516 = sadd.s32 %s515, %s513
        %s517 = smul.addr %s511, 4
        %s518 = sadd.s32 %s516, %s517
        %s519 = smul.addr %s518, 8
        %s520 = scalar_lea.vmem %s3, %s519
      $region52: #{transformer_forward.28} parent=47 // pred_fallthru
        _
    $region48: #{transformer_forward.28} parent=5 // pred_fallthru
      _
  $region6: #{transformer_forward.28} parent=0 // loop_footer
    %s13 = sadd.s32 1, %s9
  $region7: #{transformer_forward.28} parent=0 // loop_footer_branch
    %8 = sbr.rel target = $region3
  $region8: #{transformer_forward.28} parent=0 // loop_exit
    _

// kernel: transformer_forward.30
$region0: #{transformer_forward.30}
  #allocation0 [shape = 'u32[]', space=smem, size = 0x4, offset = 0x4, fixed_abs, tag = 'smem constant byte address 0x4 - core index']
  #allocation1 [shape = 'u32[144,128]{1,0:T(1,128)}', space=vmem, size = 0x12000, scoped, tag = 'internal scratch']
  %s0 = inlined_call_operand.vmem [shape: f32[16,32], index: 0, kind: input, shape index: {}]
  %s1 = inlined_call_operand.vmem [shape: f32[16,32], index: 1, kind: input, shape index: {}]
  %s2 = inlined_call_operand.vmem [shape: f32[1,32], index: 2, kind: input, shape index: {}]
  %s3 = inlined_call_operand.vmem [shape: f32[1,32], index: 3, kind: input, shape index: {}]
  %s4 = inlined_call_operand.vmem [shape: f32[16,32], index: 4, kind: output, shape index: {}]
  %s5 = sld [smem:[#allocation0]]
  $region26: #{transformer_forward.30} parent=0
    _
  %s7 = ssub.s32 1, %s5
  %s8 = scalar_select 0, %s7, %s5
  // Predicated region
  $region2: #{transformer_forward.30} parent=0 // pred_check
    _
  $region3: #{transformer_forward.30} parent=0 // pred_check_branch
    %10 = sbr.rel (0) target = $region5
  $region4: #{transformer_forward.30} parent=0 // pred_region
    _
  $region5: #{transformer_forward.30} parent=0 // pred_fallthru
    _
  // Predicated region
  $region6: #{transformer_forward.30} parent=0 // pred_check
    _
  $region7: #{transformer_forward.30} parent=0 // pred_check_branch
    %12 = sbr.rel (0) target = $region9
  $region8: #{transformer_forward.30} parent=0 // pred_region
    _
  $region9: #{transformer_forward.30} parent=0 // pred_fallthru
    _
  // Predicated region
  $region10: #{transformer_forward.30} parent=0 // pred_check
    _
  $region11: #{transformer_forward.30} parent=0 // pred_check_branch
    %14 = sbr.rel (0) target = $region13
  $region12: #{transformer_forward.30} parent=0 // pred_region
    _
  $region13: #{transformer_forward.30} parent=0 // pred_fallthru
    _
  // Predicated region
  $region14: #{transformer_forward.30} parent=0 // pred_check
    _
  $region15: #{transformer_forward.30} parent=0 // pred_check_branch
    %16 = sbr.rel (0) target = $region17
  $region16: #{transformer_forward.30} parent=0 // pred_region
    _
  $region17: #{transformer_forward.30} parent=0 // pred_fallthru
    _
  %v17 = vld [vmem:[%s0] sm:$0xff]
  %v18 = vld [vmem:[%s0 + $0x8] sm:$0xff]
  %v19 = vld [vmem:[%s1] sm:$0xff]
  %v20 = vld [vmem:[%s1 + $0x8] sm:$0xff]
  %v21 = vadd.f32 %v17, %v19
  %v22 = vadd.f32 %v18, %v20
  %vm23 = vcmask 261120
  %v24 = vsel %vm23, %v21, 0.0
  %25 = vadd.xlane.f32.xlu0 %v24
  %v26 = vpop.xlane.xlu0 %25
  %v27 = vsel %vm23, %v22, 0.0
  %28 = vadd.xlane.f32.xlu0 %v27
  %v29 = vpop.xlane.xlu0 %28
  %v30 = vrcp.pop 32.0
  %v31 = vmul.f32 %v26, %v30
  %v32 = vmul.f32 %v29, %v30
  %v33 = vsub.f32 %v21, %v31
  %v34 = vsub.f32 %v22, %v32
  %v35 = vmul.f32 %v33, %v33
  %v36 = vmul.f32 %v34, %v34
  %v37 = vsel %vm23, %v35, 0.0
  %38 = vadd.xlane.f32.xlu0 %v37
  %v39 = vpop.xlane.xlu0 %38
  %v40 = vsel %vm23, %v36, 0.0
  %41 = vadd.xlane.f32.xlu0 %v40
  %v42 = vpop.xlane.xlu0 %41
  %v43 = vmul.f32 %v39, %v30
  %v44 = vmul.f32 %v42, %v30
  %v45 = vadd.f32 %v43, 1e-05
  %v46 = vadd.f32 %v44, 1e-05
  %v47 = vrsqrt.pop %v45
  %v48 = vrsqrt.pop %v46
  %v49 = vmul.f32 %v33, %v47
  %v50 = vmul.f32 %v34, %v48
  %v51 = vld [vmem:[%s2] sm:$0x1]
  %v53 = vlaneseq
  %v54 = vshrl.u32 %v53, 7
  %v55 = vsub.s32 0, %v54
  %v56 = vrot.slane %v51, %v55
  %v58 = vmul.f32 %v49, %v56
  %v59 = vmul.f32 %v50, %v56
  %v60 = vld [vmem:[%s3] sm:$0x1]
  %v62 = vlaneseq
  %v63 = vshrl.u32 %v62, 7
  %v64 = vsub.s32 0, %v63
  %v65 = vrot.slane %v60, %v64
  %v67 = vadd.f32 %v58, %v65
  %v68 = vadd.f32 %v59, %v65
  %69 = vst.msk [vmem:[%s4] sm:$0xff] %vm23, %v67
  %70 = vst.msk [vmem:[%s4 + $0x8] sm:$0xff] %vm23, %v68
  // Predicated region
  $region18: #{transformer_forward.30} parent=0 // pred_check
    _
  $region19: #{transformer_forward.30} parent=0 // pred_check_branch
    %72 = sbr.rel (0) target = $region21
  $region20: #{transformer_forward.30} parent=0 // pred_region
    _
  $region21: #{transformer_forward.30} parent=0 // pred_fallthru
    _
  // Predicated region
  $region22: #{transformer_forward.30} parent=0 // pred_check
    _
  $region23: #{transformer_forward.30} parent=0 // pred_check_branch
    %74 = sbr.rel (0) target = $region25
  $region24: #{transformer_forward.30} parent=0 // pred_region
    _
  $region25: #{transformer_forward.30} parent=0 // pred_fallthru
    _

// kernel: transformer_forward.21
$region0: #{transformer_forward.21}
  #allocation0 [shape = 'u32[]', space=smem, size = 0x4, offset = 0x4, fixed_abs, tag = 'smem constant byte address 0x4 - core index']
  #allocation1 [shape = 'u32[144,128]{1,0:T(1,128)}', space=vmem, size = 0x12000, scoped, tag = 'internal scratch']
  #allocation2 [shape = 'f32[8,1]{1,0:T(8,128)}', space=vmem, size = 0x1000, scoped, tag = 'scratch operand']
  #allocation3 [shape = 'f32[8,1]{1,0:T(8,128)}', space=vmem, size = 0x1000, scoped, tag = 'scratch operand']
  #allocation4 [shape = 'f32[8,8]{1,0:T(8,128)}', space=vmem, size = 0x1000, scoped, tag = 'scratch operand']
  %s0 = inlined_call_operand.vmem [shape: bf16[2,4,8,8], index: 0, kind: input, shape index: {}]
  %s1 = inlined_call_operand.vmem [shape: bf16[2,4,8,8], index: 1, kind: input, shape index: {}]
  %s2 = inlined_call_operand.vmem [shape: bf16[2,4,8,8], index: 2, kind: input, shape index: {}]
  %s3 = inlined_call_operand.vmem [shape: f32[2,4,8,8], index: 3, kind: output, shape index: {}]
  %s4 = sld [smem:[#allocation0]]
  $region53: #{transformer_forward.21} parent=0
    _
  %s6 = ssub.s32 1, %s4
  %s7 = scalar_select 0, %s6, %s4
  loop: start=0, step=1, limit=10
  $region2: #{transformer_forward.21} parent=0 // loop_pre_header
    _
  $region3: #{transformer_forward.21} parent=0 // loop_header
    %s9 = sphi 0, %s13
    %p10 = scmp.ge.s32.totalorder %s9, 10
    %s16 = sphi 0, %s42
    %s17 = sphi 0, %s38
    %s18 = sphi 0, %s34
    %s19 = sphi 0, %s30
    %s20 = sphi 0, %s16
    %s21 = sphi 0, %s17
    %s22 = sphi 0, %s18
    %s23 = sphi 0, %s19
    %s24 = sphi 0, %s20
    %s25 = sphi 0, %s21
    %s26 = sphi 0, %s22
    %s27 = sphi 0, %s23
    %s49 = sphi 0, %s51
    %s52 = sphi 0, %s49
    %s53 = sphi 0, %s52
    %s69 = sphi 0, %s53
    %s79 = sphi 0, %s81
    %s82 = sphi 0, %s79
    %s83 = sphi 0, %s82
    %s99 = sphi 0, %s83
    %s109 = sphi 0, %s111
    %s112 = sphi 0, %s109
    %s113 = sphi 0, %s112
    %s129 = sphi 0, %s113
    %s139 = sphi 0, %s141
    %s142 = sphi 0, %s139
    %s143 = sphi 0, %s142
    %s159 = sphi 0, %s143
  $region4: #{transformer_forward.21} parent=0 // loop_header_branch
    %12 = sbr.rel (%p10) target = $region8
  $region5: #{transformer_forward.21} parent=0 // loop_body
    %s14 = ssub.s32 %s9, 1
    %s15 = ssub.s32 %s9, 2
    %s28 = sadd.s32 1, %s19
    %p29 = scmp.ge.s32.totalorder %s28, 1
    %s30 = scalar_select %p29, 0, %s28
    %s31 = sadd.s32 1, %s18
    %s32 = scalar_select %p29, %s31, %s18
    %p33 = scmp.ge.s32.totalorder %s32, 1
    %s34 = scalar_select %p33, 0, %s32
    %s35 = sadd.s32 1, %s17
    %s36 = scalar_select %p33, %s35, %s17
    %p37 = scmp.ge.s32.totalorder %s36, 4
    %s38 = scalar_select %p37, 0, %s36
    %s39 = sadd.s32 1, %s16
    %s40 = scalar_select %p37, %s39, %s16
    %p41 = scmp.ge.s32.totalorder %s40, 2
    %s42 = scalar_select %p41, 0, %s40
    %s43 = ssub.s32 %s16, %s42
    %s44 = ssub.s32 %s17, %s38
    %s45 = sor.u32 %s43, %s44
    %s46 = ssub.s32 %s18, %s34
    %s47 = sor.u32 %s45, %s46
    %p48 = scmp.eq.s32.totalorder %s47, 0
    %s50 = sadd.s32 %s49, 1
    %s51 = scalar_select %p48, %s49, %s50
    %p54 = pneg %p48
    %p55 = scmp.eq.s32.totalorder %s9, 7
    %p56 = por %p54, %p55
    %p57 = scmp.ne.s32.totalorder %s49, %s52
    %p58 = scmp.eq.s32.totalorder %s9, 0
    %p59 = por %p57, %p58
    %p60 = scmp.ne.s32.totalorder %s49, %s52
    %p61 = scmp.eq.s32.totalorder %s14, 7
    %p62 = por %p60, %p61
    %p63 = scmp.ne.s32.totalorder %s52, %s53
    %p64 = scmp.eq.s32.totalorder %s14, 0
    %p65 = por %p63, %p64
    %p66 = scmp.ne.s32.totalorder %s52, %s53
    %p67 = scmp.eq.s32.totalorder %s15, 7
    %p68 = por %p66, %p67
    %p70 = scmp.ne.s32.totalorder %s53, %s69
    %p71 = scmp.eq.s32.totalorder %s15, 0
    %p72 = por %p70, %p71
    %s73 = ssub.s32 %s16, %s42
    %s74 = ssub.s32 %s17, %s38
    %s75 = sor.u32 %s73, %s74
    %s76 = ssub.s32 %s19, %s30
    %s77 = sor.u32 %s75, %s76
    %p78 = scmp.eq.s32.totalorder %s77, 0
    %s80 = sadd.s32 %s79, 1
    %s81 = scalar_select %p78, %s79, %s80
    %p84 = pneg %p78
    %p85 = scmp.eq.s32.totalorder %s9, 7
    %p86 = por %p84, %p85
    %p87 = scmp.ne.s32.totalorder %s79, %s82
    %p88 = scmp.eq.s32.totalorder %s9, 0
    %p89 = por %p87, %p88
    %p90 = scmp.ne.s32.totalorder %s79, %s82
    %p91 = scmp.eq.s32.totalorder %s14, 7
    %p92 = por %p90, %p91
    %p93 = scmp.ne.s32.totalorder %s82, %s83
    %p94 = scmp.eq.s32.totalorder %s14, 0
    %p95 = por %p93, %p94
    %p96 = scmp.ne.s32.totalorder %s82, %s83
    %p97 = scmp.eq.s32.totalorder %s15, 7
    %p98 = por %p96, %p97
    %p100 = scmp.ne.s32.totalorder %s83, %s99
    %p101 = scmp.eq.s32.totalorder %s15, 0
    %p102 = por %p100, %p101
    %s103 = ssub.s32 %s16, %s42
    %s104 = ssub.s32 %s17, %s38
    %s105 = sor.u32 %s103, %s104
    %s106 = ssub.s32 %s19, %s30
    %s107 = sor.u32 %s105, %s106
    %p108 = scmp.eq.s32.totalorder %s107, 0
    %s110 = sadd.s32 %s109, 1
    %s111 = scalar_select %p108, %s109, %s110
    %p114 = pneg %p108
    %p115 = scmp.eq.s32.totalorder %s9, 7
    %p116 = por %p114, %p115
    %p117 = scmp.ne.s32.totalorder %s109, %s112
    %p118 = scmp.eq.s32.totalorder %s9, 0
    %p119 = por %p117, %p118
    %p120 = scmp.ne.s32.totalorder %s109, %s112
    %p121 = scmp.eq.s32.totalorder %s14, 7
    %p122 = por %p120, %p121
    %p123 = scmp.ne.s32.totalorder %s112, %s113
    %p124 = scmp.eq.s32.totalorder %s14, 0
    %p125 = por %p123, %p124
    %p126 = scmp.ne.s32.totalorder %s112, %s113
    %p127 = scmp.eq.s32.totalorder %s15, 7
    %p128 = por %p126, %p127
    %p130 = scmp.ne.s32.totalorder %s113, %s129
    %p131 = scmp.eq.s32.totalorder %s15, 0
    %p132 = por %p130, %p131
    %s133 = ssub.s32 %s16, %s42
    %s134 = ssub.s32 %s17, %s38
    %s135 = sor.u32 %s133, %s134
    %s136 = ssub.s32 %s18, %s34
    %s137 = sor.u32 %s135, %s136
    %p138 = scmp.eq.s32.totalorder %s137, 0
    %s140 = sadd.s32 %s139, 1
    %s141 = scalar_select %p138, %s139, %s140
    %p144 = pneg %p138
    %p145 = scmp.eq.s32.totalorder %s9, 7
    %p146 = por %p144, %p145
    %p147 = scmp.ne.s32.totalorder %s139, %s142
    %p148 = scmp.eq.s32.totalorder %s9, 0
    %p149 = por %p147, %p148
    %p150 = scmp.ne.s32.totalorder %s139, %s142
    %p151 = scmp.eq.s32.totalorder %s14, 7
    %p152 = por %p150, %p151
    %p153 = scmp.ne.s32.totalorder %s142, %s143
    %p154 = scmp.eq.s32.totalorder %s14, 0
    %p155 = por %p153, %p154
    %p156 = scmp.ne.s32.totalorder %s142, %s143
    %p157 = scmp.eq.s32.totalorder %s15, 7
    %p158 = por %p156, %p157
    %p160 = scmp.ne.s32.totalorder %s143, %s159
    %p161 = scmp.eq.s32.totalorder %s15, 0
    %p162 = por %p160, %p161
    %p163 = scmp.le.s32.totalorder 1, %s9
    %p164 = scmp.lt.s32.totalorder %s9, 9
    %p165 = pnand %p163, %p164
    %p166 = pneg %p165
    // Predicated region
    $region9: #{transformer_forward.21} parent=5 // pred_check
      _
    $region10: #{transformer_forward.21} parent=5 // pred_check_branch
      %168 = sbr.rel (%p165) target = $region12
    $region11: #{transformer_forward.21} parent=5 // pred_region
      %s169 = ssub.s32 %s9, 1
    $region12: #{transformer_forward.21} parent=5 // pred_fallthru
      _
    %p170 = scmp.lt.s32.totalorder %s9, 8
    // Predicated region
    $region13: #{transformer_forward.21} parent=5 // pred_check
      %p171 = pneg %p170
    $region14: #{transformer_forward.21} parent=5 // pred_check_branch
      %173 = sbr.rel (%p171) target = $region16
    $region15: #{transformer_forward.21} parent=5 // pred_region
      // Predicated region
      $region17: #{transformer_forward.21} parent=15 // pred_check
        %p174 = pneg %p59
      $region18: #{transformer_forward.21} parent=15 // pred_check_branch
        %176 = sbr.rel (%p174) target = $region20
      $region19: #{transformer_forward.21} parent=15 // pred_region
        %p177 = scmp.lt.s32.totalorder %s16, 1
        %s178 = scalar_select %p177, %s16, 1
        %p179 = scmp.lt.s32.totalorder %s17, 3
        %s180 = scalar_select %p179, %s17, 3
        %p181 = scmp.lt.s32.totalorder %s18, 0
        %s182 = scalar_select %p181, %s18, 0
        %s183 = sadd.s32 %s182, %s180
        %s184 = smul.addr %s178, 4
        %s185 = sadd.s32 %s183, %s184
        %s186 = smul.addr %s185, 4
        %s187 = scalar_lea.vmem %s0, %s186
      $region20: #{transformer_forward.21} parent=15 // pred_fallthru
        _
      // Predicated region
      $region21: #{transformer_forward.21} parent=15 // pred_check
        %p188 = pneg %p89
      $region22: #{transformer_forward.21} parent=15 // pred_check_branch
        %190 = sbr.rel (%p188) target = $region24
      $region23: #{transformer_forward.21} parent=15 // pred_region
        %p191 = scmp.lt.s32.totalorder %s16, 1
        %s192 = scalar_select %p191, %s16, 1
        %p193 = scmp.lt.s32.totalorder %s17, 3
        %s194 = scalar_select %p193, %s17, 3
        %p195 = scmp.lt.s32.totalorder %s19, 0
        %s196 = scalar_select %p195, %s19, 0
        %s197 = sadd.s32 %s196, %s194
        %s198 = smul.addr %s192, 4
        %s199 = sadd.s32 %s197, %s198
        %s200 = smul.addr %s199, 4
        %s201 = scalar_lea.vmem %s1, %s200
      $region24: #{transformer_forward.21} parent=15 // pred_fallthru
        _
      // Predicated region
      $region25: #{transformer_forward.21} parent=15 // pred_check
        %p202 = pneg %p119
      $region26: #{transformer_forward.21} parent=15 // pred_check_branch
        %204 = sbr.rel (%p202) target = $region28
      $region27: #{transformer_forward.21} parent=15 // pred_region
        %p205 = scmp.lt.s32.totalorder %s16, 1
        %s206 = scalar_select %p205, %s16, 1
        %p207 = scmp.lt.s32.totalorder %s17, 3
        %s208 = scalar_select %p207, %s17, 3
        %p209 = scmp.lt.s32.totalorder %s19, 0
        %s210 = scalar_select %p209, %s19, 0
        %s211 = sadd.s32 %s210, %s208
        %s212 = smul.addr %s206, 4
        %s213 = sadd.s32 %s211, %s212
        %s214 = smul.addr %s213, 4
        %s215 = scalar_lea.vmem %s2, %s214
      $region28: #{transformer_forward.21} parent=15 // pred_fallthru
        _
    $region16: #{transformer_forward.21} parent=5 // pred_fallthru
      _
    %p216 = scmp.le.s32.totalorder 1, %s9
    %p217 = scmp.lt.s32.totalorder %s9, 9
    %p218 = pnand %p216, %p217
    %p219 = pneg %p218
    // Predicated region
    $region29: #{transformer_forward.21} parent=5 // pred_check
      _
    $region30: #{transformer_forward.21} parent=5 // pred_check_branch
      %221 = sbr.rel (%p218) target = $region32
    $region31: #{transformer_forward.21} parent=5 // pred_region
      %s222 = ssub.s32 %s9, 1
      %p223 = scmp.lt.s32.totalorder %s20, 1
      %s224 = scalar_select %p223, %s20, 1
      %p225 = scmp.lt.s32.totalorder %s21, 3
      %s226 = scalar_select %p225, %s21, 3
      %p227 = scmp.lt.s32.totalorder %s22, 0
      %s228 = scalar_select %p227, %s22, 0
      %s229 = sadd.s32 %s228, %s226
      %s230 = smul.addr %s224, 4
      %s231 = sadd.s32 %s229, %s230
      %s232 = smul.addr %s231, 4
      %s233 = scalar_lea.vmem %s0, %s232
      %p234 = pneg %p65
      %p235 = pneg %p62
      %p236 = scmp.lt.s32.totalorder %s20, 1
      %s237 = scalar_select %p236, %s20, 1
      %p238 = scmp.lt.s32.totalorder %s21, 3
      %s239 = scalar_select %p238, %s21, 3
      %p240 = scmp.lt.s32.totalorder %s23, 0
      %s241 = scalar_select %p240, %s23, 0
      %s242 = sadd.s32 %s241, %s239
      %s243 = smul.addr %s237, 4
      %s244 = sadd.s32 %s242, %s243
      %s245 = smul.addr %s244, 4
      %s246 = scalar_lea.vmem %s1, %s245
      %p247 = pneg %p95
      %p248 = pneg %p92
      %p249 = scmp.lt.s32.totalorder %s20, 1
      %s250 = scalar_select %p249, %s20, 1
      %p251 = scmp.lt.s32.totalorder %s21, 3
      %s252 = scalar_select %p251, %s21, 3
      %p253 = scmp.lt.s32.totalorder %s23, 0
      %s254 = scalar_select %p253, %s23, 0
      %s255 = sadd.s32 %s254, %s252
      %s256 = smul.addr %s250, 4
      %s257 = sadd.s32 %s255, %s256
      %s258 = smul.addr %s257, 4
      %s259 = scalar_lea.vmem %s2, %s258
      %p260 = pneg %p125
      %p261 = pneg %p122
      %p262 = pneg %p155
      %p263 = pneg %p152
      %p264 = scmp.lt.s32.totalorder %s20, 1
      %s265 = scalar_select %p264, %s20, 1
      %p266 = scmp.lt.s32.totalorder %s21, 3
      %s267 = scalar_select %p266, %s21, 3
      %p268 = scmp.lt.s32.totalorder %s22, 0
      %s269 = scalar_select %p268, %s22, 0
      %s270 = sadd.s32 %s269, %s267
      %s271 = smul.addr %s265, 4
      %s272 = sadd.s32 %s270, %s271
      %s273 = smul.addr %s272, 8
      %s274 = scalar_lea.vmem %s3, %s273
      %p275 = scmp.lt.s32.totalorder %s20, 1
      %s276 = scalar_select %p275, %s20, 1
      %p277 = scmp.lt.s32.totalorder %s21, 3
      %s278 = scalar_select %p277, %s21, 3
      %p279 = scmp.lt.s32.totalorder %s22, 0
      %s280 = scalar_select %p279, %s22, 0
      %s281 = sadd.s32 %s280, %s278
      %s282 = smul.addr %s276, 4
      %s283 = sadd.s32 %s281, %s282
      %s284 = smul.addr %s283, 4
      %s285 = scalar_lea.vmem %s0, %s284
      %p286 = scmp.lt.s32.totalorder %s20, 1
      %s287 = scalar_select %p286, %s20, 1
      %p288 = scmp.lt.s32.totalorder %s21, 3
      %s289 = scalar_select %p288, %s21, 3
      %p290 = scmp.lt.s32.totalorder %s23, 0
      %s291 = scalar_select %p290, %s23, 0
      %s292 = sadd.s32 %s291, %s289
      %s293 = smul.addr %s287, 4
      %s294 = sadd.s32 %s292, %s293
      %s295 = smul.addr %s294, 4
      %s296 = scalar_lea.vmem %s1, %s295
      %p297 = scmp.lt.s32.totalorder %s20, 1
      %s298 = scalar_select %p297, %s20, 1
      %p299 = scmp.lt.s32.totalorder %s21, 3
      %s300 = scalar_select %p299, %s21, 3
      %p301 = scmp.lt.s32.totalorder %s23, 0
      %s302 = scalar_select %p301, %s23, 0
      %s303 = sadd.s32 %s302, %s300
      %s304 = smul.addr %s298, 4
      %s305 = sadd.s32 %s303, %s304
      %s306 = smul.addr %s305, 4
      %s307 = scalar_lea.vmem %s2, %s306
      %p308 = scmp.lt.s32.totalorder %s20, 1
      %s309 = scalar_select %p308, %s20, 1
      %p310 = scmp.lt.s32.totalorder %s21, 3
      %s311 = scalar_select %p310, %s21, 3
      %p312 = scmp.lt.s32.totalorder %s22, 0
      %s313 = scalar_select %p312, %s22, 0
      %s314 = sadd.s32 %s313, %s311
      %s315 = smul.addr %s309, 4
      %s316 = sadd.s32 %s314, %s315
      %s317 = smul.addr %s316, 8
      %s318 = scalar_lea.vmem %s3, %s317
      %p320 = scmp.eq.s32.totalorder %s23, 0
      // Predicated region
      $region33: #{transformer_forward.21} parent=31 // pred_check
        %p321 = pneg %p320
      $region34: #{transformer_forward.21} parent=31 // pred_check_branch
        %323 = sbr.rel (%p321) target = $region36
      $region35: #{transformer_forward.21} parent=31 // pred_region
        %vm324 = vcmask 7168
        %325 = vst.msk [vmem:[#allocation2] sm:$0xff] %vm324, -inf
        %326 = vst.msk [vmem:[#allocation3] sm:$0xff] %vm324, 0.0
        %vm327 = vcmask 64512
        %328 = vst.msk [vmem:[#allocation4] sm:$0xff] %vm327, 0.0
      $region36: #{transformer_forward.21} parent=31 // pred_fallthru
        _
      %v329 = vld [vmem:[%s285] sm:$0xf]
      %v330 = vld [vmem:[%s296] sm:$0xf]
      %v331 = vld [vmem:[%s307] sm:$0xf]
      %vm332 = vcmask 64512
      %v334 = vsel %vm332, %v329, 0
      %v337 = vsel %vm332, %v330, 0
      %339 = vmatprep.subr.bf16.mxu0 0
      %340 = vmatpush1.bf16.xpose.msra.mxu0 %v337
      %341 = vmatprep.subr.bf16.mxu0 0
      %342 = vmatpush1.bf16.xpose.msra.mxu0 0
      %343 = vmatprep.subr.bf16.mxu0 0
      %344 = vmatpush1.bf16.xpose.msra.mxu0 0
      %345 = vmatprep.subr.bf16.mxu0 0
      %346 = vmatpush1.bf16.xpose.msra.mxu0 0
      %347 = vmatprep.subr.bf16.mxu0 0
      %348 = vmatpush1.bf16.xpose.msra.mxu0 0
      %349 = vmatprep.subr.bf16.mxu0 0
      %350 = vmatpush1.bf16.xpose.msra.mxu0 0
      %351 = vmatprep.subr.bf16.mxu0 0
      %352 = vmatpush1.bf16.xpose.msra.mxu0 0
      %353 = vmatprep.subr.bf16.mxu0 0
      %354 = vmatpush1.bf16.xpose.msra.mxu0 0
      %355 = vmatprep.subr.bf16.mxu0 0
      %356 = vmatpush1.bf16.xpose.msra.mxu0 0
      %357 = vmatprep.subr.bf16.mxu0 0
      %358 = vmatpush1.bf16.xpose.msra.mxu0 0
      %359 = vmatprep.subr.bf16.mxu0 0
      %360 = vmatpush1.bf16.xpose.msra.mxu0 0
      %361 = vmatprep.subr.bf16.mxu0 0
      %362 = vmatpush1.bf16.xpose.msra.mxu0 0
      %363 = vmatprep.subr.bf16.mxu0 0
      %364 = vmatpush1.bf16.xpose.msra.mxu0 0
      %365 = vmatprep.subr.bf16.mxu0 0
      %366 = vmatpush1.bf16.xpose.msra.mxu0 0
      %367 = vmatprep.subr.bf16.mxu0 0
      %368 = vmatpush1.bf16.xpose.msra.mxu0 0
      %369 = vmatprep.subr.bf16.mxu0 0
      %370 = vmatpush1.bf16.xpose.msra.mxu0 0
      %371 = vmatprep.mubr.bf16.mxu0 0
      %372 = vmatmul.mubr.bf16.gmra.mrb[0].mxu0 %v334
      %v373 = vpop.f32.mrb[0].mxu0
      %v374 = vadd.f32 0.0, %v373
      %v375 = vpop.f32.mrb[0].mxu0
      %v376 = vpop.f32.mrb[0].mxu0
      %v377 = vpop.f32.mrb[0].mxu0
      %378 = vdwg.mxu0
      %v379 = vmul.f32 %v374, 0.35355338
      %v380 = vld [vmem:[#allocation2] sm:$0xff]
      %v381 = vsel %vm332, %v379, -inf
      %382 = vmax.xlane.f32.xlu0 %v381
      %v383 = vpop.xlane.xlu0 %382
      %v384 = vmax.f32 %v380, %v383
      %v385 = vsub.f32 %v380, %v384
      %v386 = vmul.f32 %v385, 1.442695
      %v387 = vpow.pop %v386
      %389 = vset.pattern.permute.xlu0 0
      %390 = vperm.xlu0 %389, %v384
      %v391 = vpop.permute.xlu0 %390
      %v393 = vsub.f32 %v379, %v391
      %v394 = vmul.f32 %v393, 1.442695
      %v395 = vpow.pop %v394
      %v396 = vld [vmem:[#allocation3] sm:$0xff]
      %v397 = vmul.f32 %v387, %v396
      %v398 = vsel %vm332, %v395, 0.0
      %399 = vadd.xlane.f32.xlu0 %v398
      %v400 = vpop.xlane.xlu0 %399
      %v401 = vadd.f32 %v397, %v400
      %vm402 = vcmask 7168
      %403 = vst.msk [vmem:[#allocation3] sm:$0xff] %vm402, %v401
      %v404 = vld [vmem:[#allocation4] sm:$0xff]
      %406 = vset.pattern.permute.xlu0 0
      %407 = vperm.xlu0 %406, %v387
      %v408 = vpop.permute.xlu0 %407
      %v410 = vmul.f32 %v408, %v404
      %v411 = vpack.c.bf16 %v395, %v395
      %v413 = vsel %vm332, %v411, 0
      %vm415 = vcmask 1043456
      %v417 = vsel %vm415, %v331, 0
      %419 = vmatprep.subr.bf16.mxu0 0
      %420 = vmatpush1.bf16.msra.mxu0 %v417
      %421 = vmatprep.subr.bf16.mxu0 0
      %422 = vmatpush1.bf16.msra.mxu0 0
      %423 = vmatprep.subr.bf16.mxu0 0
      %424 = vmatpush1.bf16.msra.mxu0 0
      %425 = vmatprep.subr.bf16.mxu0 0
      %426 = vmatpush1.bf16.msra.mxu0 0
      %427 = vmatprep.subr.bf16.mxu0 0
      %428 = vmatpush1.bf16.msra.mxu0 0
      %429 = vmatprep.subr.bf16.mxu0 0
      %430 = vmatpush1.bf16.msra.mxu0 0
      %431 = vmatprep.subr.bf16.mxu0 0
      %432 = vmatpush1.bf16.msra.mxu0 0
      %433 = vmatprep.subr.bf16.mxu0 0
      %434 = vmatpush1.bf16.msra.mxu0 0
      %435 = vmatprep.subr.bf16.mxu0 0
      %436 = vmatpush1.bf16.msra.mxu0 0
      %437 = vmatprep.subr.bf16.mxu0 0
      %438 = vmatpush1.bf16.msra.mxu0 0
      %439 = vmatprep.subr.bf16.mxu0 0
      %440 = vmatpush1.bf16.msra.mxu0 0
      %441 = vmatprep.subr.bf16.mxu0 0
      %442 = vmatpush1.bf16.msra.mxu0 0
      %443 = vmatprep.subr.bf16.mxu0 0
      %444 = vmatpush1.bf16.msra.mxu0 0
      %445 = vmatprep.subr.bf16.mxu0 0
      %446 = vmatpush1.bf16.msra.mxu0 0
      %447 = vmatprep.subr.bf16.mxu0 0
      %448 = vmatpush1.bf16.msra.mxu0 0
      %449 = vmatprep.subr.bf16.mxu0 0
      %450 = vmatpush1.bf16.msra.mxu0 0
      %451 = vmatprep.mubr.bf16.mxu0 0
      %452 = vmatmul.mubr.bf16.gmra.mrb[0].mxu0 %v413
      %v453 = vpop.f32.mrb[0].mxu0
      %v454 = vadd.f32 0.0, %v453
      %v455 = vpop.f32.mrb[0].mxu0
      %v456 = vpop.f32.mrb[0].mxu0
      %v457 = vpop.f32.mrb[0].mxu0
      %458 = vdwg.mxu0
      %v459 = vadd.f32 %v410, %v454
      %460 = vst.msk [vmem:[#allocation4] sm:$0xff] %vm332, %v459
      %461 = vst.msk [vmem:[#allocation2] sm:$0xff] %vm402, %v384
      // Predicated region
      $region37: #{transformer_forward.21} parent=31 // pred_check
        %p462 = pneg %p320
      $region38: #{transformer_forward.21} parent=31 // pred_check_branch
        %464 = sbr.rel (%p462) target = $region40
      $region39: #{transformer_forward.21} parent=31 // pred_region
        %v465 = vld [vmem:[#allocation4] sm:$0xff]
        %v466 = vld [vmem:[#allocation3] sm:$0xff]
        %468 = vset.pattern.permute.xlu0 0
        %469 = vperm.xlu0 %468, %v466
        %v470 = vpop.permute.xlu0 %469
        %v472 = vrcp.pop %v470
        %v473 = vmul.f32 %v465, %v472
        %474 = vst.msk [vmem:[%s318] sm:$0xff] %vm332, %v473
      $region40: #{transformer_forward.21} parent=31 // pred_fallthru
        _
      %p475 = scmp.lt.s32.totalorder %s20, 1
      %s476 = scalar_select %p475, %s20, 1
      %p477 = scmp.lt.s32.totalorder %s21, 3
      %s478 = scalar_select %p477, %s21, 3
      %p479 = scmp.lt.s32.totalorder %s22, 0
      %s480 = scalar_select %p479, %s22, 0
      %s481 = sadd.s32 %s480, %s478
      %s482 = smul.addr %s476, 4
      %s483 = sadd.s32 %s481, %s482
      %s484 = smul.addr %s483, 8
      %s485 = scalar_lea.vmem %s3, %s484
      // Predicated region
      $region41: #{transformer_forward.21} parent=31 // pred_check
        %p486 = pneg %p152
      $region42: #{transformer_forward.21} parent=31 // pred_check_branch
        %488 = sbr.rel (%p486) target = $region44
      $region43: #{transformer_forward.21} parent=31 // pred_region
        _
      $region44: #{transformer_forward.21} parent=31 // pred_fallthru
        _
    $region32: #{transformer_forward.21} parent=5 // pred_fallthru
      _
    %p489 = scmp.le.s32.totalorder 2, %s9
    // Predicated region
    $region45: #{transformer_forward.21} parent=5 // pred_check
      %p490 = pneg %p489
    $region46: #{transformer_forward.21} parent=5 // pred_check_branch
      %492 = sbr.rel (%p490) target = $region48
    $region47: #{transformer_forward.21} parent=5 // pred_region
      %s493 = ssub.s32 %s9, 2
      // Predicated region
      $region49: #{transformer_forward.21} parent=47 // pred_check
        %p494 = pneg %p158
      $region50: #{transformer_forward.21} parent=47 // pred_check_branch
        %496 = sbr.rel (%p494) target = $region52
      $region51: #{transformer_forward.21} parent=47 // pred_region
        %p497 = scmp.lt.s32.totalorder %s24, 1
        %s498 = scalar_select %p497, %s24, 1
        %p499 = scmp.lt.s32.totalorder %s25, 3
        %s500 = scalar_select %p499, %s25, 3
        %p501 = scmp.lt.s32.totalorder %s26, 0
        %s502 = scalar_select %p501, %s26, 0
        %s503 = sadd.s32 %s502, %s500
        %s504 = smul.addr %s498, 4
        %s505 = sadd.s32 %s503, %s504
        %s506 = smul.addr %s505, 8
        %s507 = scalar_lea.vmem %s3, %s506
      $region52: #{transformer_forward.21} parent=47 // pred_fallthru
        _
    $region48: #{transformer_forward.21} parent=5 // pred_fallthru
      _
  $region6: #{transformer_forward.21} parent=0 // loop_footer
    %s13 = sadd.s32 1, %s9
  $region7: #{transformer_forward.21} parent=0 // loop_footer_branch
    %8 = sbr.rel target = $region3
  $region8: #{transformer_forward.21} parent=0 // loop_exit
    _

// kernel: transformer_forward.24
$region0: #{transformer_forward.24}
  #allocation0 [shape = 'u32[]', space=smem, size = 0x4, offset = 0x4, fixed_abs, tag = 'smem constant byte address 0x4 - core index']
  #allocation1 [shape = 'u32[144,128]{1,0:T(1,128)}', space=vmem, size = 0x12000, scoped, tag = 'internal scratch']
  #allocation2 [shape = 'f32[16,128]{1,0:T(8,128)}', space=vmem, size = 0x2000, scoped, tag = 'scratch operand']
  %s0 = inlined_call_operand.vmem [shape: bf16[16,128], index: 0, kind: input, shape index: {}]
  %s1 = inlined_call_operand.vmem [shape: bf16[128,128], index: 1, kind: input, shape index: {}]
  %s2 = inlined_call_operand.vmem [shape: f32[1,128], index: 2, kind: input, shape index: {}]
  %s3 = inlined_call_operand.vmem [shape: f32[16,128], index: 3, kind: output, shape index: {}]
  %s4 = sld [smem:[#allocation0]]
  $region30: #{transformer_forward.24} parent=0
    _
  %s6 = ssub.s32 1, %s4
  %s7 = scalar_select 0, %s6, %s4
  // Predicated region
  $region2: #{transformer_forward.24} parent=0 // pred_check
    _
  $region3: #{transformer_forward.24} parent=0 // pred_check_branch
    %9 = sbr.rel (0) target = $region5
  $region4: #{transformer_forward.24} parent=0 // pred_region
    _
  $region5: #{transformer_forward.24} parent=0 // pred_fallthru
    _
  // Predicated region
  $region6: #{transformer_forward.24} parent=0 // pred_check
    _
  $region7: #{transformer_forward.24} parent=0 // pred_check_branch
    %11 = sbr.rel (0) target = $region9
  $region8: #{transformer_forward.24} parent=0 // pred_region
    _
  $region9: #{transformer_forward.24} parent=0 // pred_fallthru
    _
  // Predicated region
  $region10: #{transformer_forward.24} parent=0 // pred_check
    _
  $region11: #{transformer_forward.24} parent=0 // pred_check_branch
    %13 = sbr.rel (0) target = $region13
  $region12: #{transformer_forward.24} parent=0 // pred_region
    _
  $region13: #{transformer_forward.24} parent=0 // pred_fallthru
    _
  %p15 = scmp.eq.s32.totalorder 0, 0
  // Predicated region
  $region14: #{transformer_forward.24} parent=0 // pred_check
    %p16 = pneg %p15
  $region15: #{transformer_forward.24} parent=0 // pred_check_branch
    %18 = sbr.rel (%p16) target = $region17
  $region16: #{transformer_forward.24} parent=0 // pred_region
    %19 = vst [vmem:[#allocation2] sm:$0xff] 0.0
    %20 = vst [vmem:[#allocation2 + $0x8] sm:$0xff] 0.0
  $region17: #{transformer_forward.24} parent=0 // pred_fallthru
    _
  %v21 = vld [vmem:[#allocation2] sm:$0xff]
  %v22 = vld [vmem:[#allocation2 + $0x8] sm:$0xff]
  %v23 = vld [vmem:[%s0] sm:$0xf]
  %v24 = vld [vmem:[%s0 + $0x4] sm:$0xf]
  %v25 = vld [vmem:[%s1] sm:$0xf]
  %v26 = vld [vmem:[%s1 + $0x4] sm:$0xf]
  %v27 = vld [vmem:[%s1 + $0x8] sm:$0xf]
  %v28 = vld [vmem:[%s1 + $0xc] sm:$0xf]
  %v29 = vld [vmem:[%s1 + $0x10] sm:$0xf]
  %v30 = vld [vmem:[%s1 + $0x14] sm:$0xf]
  %v31 = vld [vmem:[%s1 + $0x18] sm:$0xf]
  %v32 = vld [vmem:[%s1 + $0x1c] sm:$0xf]
  %v33 = vld [vmem:[%s1 + $0x20] sm:$0xf]
  %v34 = vld [vmem:[%s1 + $0x24] sm:$0xf]
  %v35 = vld [vmem:[%s1 + $0x28] sm:$0xf]
  %v36 = vld [vmem:[%s1 + $0x2c] sm:$0xf]
  %v37 = vld [vmem:[%s1 + $0x30] sm:$0xf]
  %v38 = vld [vmem:[%s1 + $0x34] sm:$0xf]
  %v39 = vld [vmem:[%s1 + $0x38] sm:$0xf]
  %v40 = vld [vmem:[%s1 + $0x3c] sm:$0xf]
  %v43 = vunpack.c.l.b16 %v23
  %v44 = vunpack.c.l.b16 %v24
  %v45 = vpack.c.b16 %v44, %v43
  %v63 = vunpack.c.l.b16 %v25
  %v64 = vunpack.c.l.b16 %v26
  %v65 = vunpack.c.l.b16 %v27
  %v66 = vunpack.c.l.b16 %v28
  %v67 = vunpack.c.l.b16 %v29
  %v68 = vunpack.c.l.b16 %v30
  %v69 = vunpack.c.l.b16 %v31
  %v70 = vunpack.c.l.b16 %v32
  %v71 = vunpack.c.l.b16 %v33
  %v72 = vunpack.c.l.b16 %v34
  %v73 = vunpack.c.l.b16 %v35
  %v74 = vunpack.c.l.b16 %v36
  %v75 = vunpack.c.l.b16 %v37
  %v76 = vunpack.c.l.b16 %v38
  %v77 = vunpack.c.l.b16 %v39
  %v78 = vunpack.c.l.b16 %v40
  %v79 = vpack.c.b16 %v64, %v63
  %v80 = vpack.c.b16 %v66, %v65
  %v81 = vpack.c.b16 %v68, %v67
  %v82 = vpack.c.b16 %v70, %v69
  %v83 = vpack.c.b16 %v72, %v71
  %v84 = vpack.c.b16 %v74, %v73
  %v85 = vpack.c.b16 %v76, %v75
  %v86 = vpack.c.b16 %v78, %v77
  %95 = vmatprep.subr.bf16.mxu0 0
  %96 = vmatpush1.bf16.msra.mxu0 %v79
  %97 = vmatprep.subr.bf16.mxu0 0
  %98 = vmatpush1.bf16.msra.mxu0 %v80
  %99 = vmatprep.subr.bf16.mxu0 0
  %100 = vmatpush1.bf16.msra.mxu0 %v81
  %101 = vmatprep.subr.bf16.mxu0 0
  %102 = vmatpush1.bf16.msra.mxu0 %v82
  %103 = vmatprep.subr.bf16.mxu0 0
  %104 = vmatpush1.bf16.msra.mxu0 %v83
  %105 = vmatprep.subr.bf16.mxu0 0
  %106 = vmatpush1.bf16.msra.mxu0 %v84
  %107 = vmatprep.subr.bf16.mxu0 0
  %108 = vmatpush1.bf16.msra.mxu0 %v85
  %109 = vmatprep.subr.bf16.mxu0 0
  %110 = vmatpush1.bf16.msra.mxu0 %v86
  %111 = vmatprep.subr.bf16.mxu0 0
  %112 = vmatpush1.bf16.msra.mxu0 0
  %113 = vmatprep.subr.bf16.mxu0 0
  %114 = vmatpush1.bf16.msra.mxu0 0
  %115 = vmatprep.subr.bf16.mxu0 0
  %116 = vmatpush1.bf16.msra.mxu0 0
  %117 = vmatprep.subr.bf16.mxu0 0
  %118 = vmatpush1.bf16.msra.mxu0 0
  %119 = vmatprep.subr.bf16.mxu0 0
  %120 = vmatpush1.bf16.msra.mxu0 0
  %121 = vmatprep.subr.bf16.mxu0 0
  %122 = vmatpush1.bf16.msra.mxu0 0
  %123 = vmatprep.subr.bf16.mxu0 0
  %124 = vmatpush1.bf16.msra.mxu0 0
  %125 = vmatprep.subr.bf16.mxu0 0
  %126 = vmatpush1.bf16.msra.mxu0 0
  %127 = vmatprep.mubr.bf16.mxu0 0
  %128 = vmatmul.mubr.bf16.gmra.mrb[0].mxu0 %v45
  %v129 = vpop.f32.mrb[0].mxu0
  %v130 = vadd.f32 0.0, %v129
  %v131 = vpop.f32.mrb[0].mxu0
  %v132 = vpop.f32.mrb[0].mxu0
  %v133 = vadd.f32 0.0, %v132
  %v134 = vpop.f32.mrb[0].mxu0
  %135 = vdwg.mxu0
  %v136 = vadd.f32 %v21, %v130
  %v137 = vadd.f32 %v22, %v133
  %138 = vst [vmem:[#allocation2] sm:$0xff] %v136
  %139 = vst [vmem:[#allocation2 + $0x8] sm:$0xff] %v137
  // Predicated region
  $region18: #{transformer_forward.24} parent=0 // pred_check
    %p140 = pneg %p15
  $region19: #{transformer_forward.24} parent=0 // pred_check_branch
    %142 = sbr.rel (%p140) target = $region21
  $region20: #{transformer_forward.24} parent=0 // pred_region
    %v143 = vld [vmem:[#allocation2] sm:$0xff]
    %v144 = vld [vmem:[#allocation2 + $0x8] sm:$0xff]
    %v145 = vld [vmem:[%s2] sm:$0x1]
    %v147 = vlaneseq
    %v148 = vshrl.u32 %v147, 7
    %v149 = vsub.s32 0, %v148
    %v150 = vrot.slane %v145, %v149
    %v152 = vadd.f32 %v143, %v150
    %v153 = vadd.f32 %v144, %v150
    %v154 = vmax.f32 %v152, 0.0
    %v155 = vmax.f32 %v153, 0.0
    %156 = vst [vmem:[%s3] sm:$0xff] %v154
    %157 = vst [vmem:[%s3 + $0x8] sm:$0xff] %v155
  $region21: #{transformer_forward.24} parent=0 // pred_fallthru
    _
  // Predicated region
  $region22: #{transformer_forward.24} parent=0 // pred_check
    _
  $region23: #{transformer_forward.24} parent=0 // pred_check_branch
    %159 = sbr.rel (0) target = $region25
  $region24: #{transformer_forward.24} parent=0 // pred_region
    _
  $region25: #{transformer_forward.24} parent=0 // pred_fallthru
    _
  // Predicated region
  $region26: #{transformer_forward.24} parent=0 // pred_check
    _
  $region27: #{transformer_forward.24} parent=0 // pred_check_branch
    %161 = sbr.rel (0) target = $region29
  $region28: #{transformer_forward.24} parent=0 // pred_region
    _
  $region29: #{transformer_forward.24} parent=0 // pred_fallthru
    _

// kernel: transformer_forward.39
$region0: #{transformer_forward.39}
  #allocation0 [shape = 'u32[]', space=smem, size = 0x4, offset = 0x4, fixed_abs, tag = 'smem constant byte address 0x4 - core index']
  #allocation1 [shape = 'u32[144,128]{1,0:T(1,128)}', space=vmem, size = 0x12000, scoped, tag = 'internal scratch']
  #allocation2 [shape = 'f32[16,128]{1,0:T(8,128)}', space=vmem, size = 0x2000, scoped, tag = 'scratch operand']
  %s0 = inlined_call_operand.vmem [shape: bf16[16,128], index: 0, kind: input, shape index: {}]
  %s1 = inlined_call_operand.vmem [shape: bf16[128,128], index: 1, kind: input, shape index: {}]
  %s2 = inlined_call_operand.vmem [shape: f32[1,128], index: 2, kind: input, shape index: {}]
  %s3 = inlined_call_operand.vmem [shape: f32[16,128], index: 3, kind: output, shape index: {}]
  %s4 = sld [smem:[#allocation0]]
  $region30: #{transformer_forward.39} parent=0
    _
  %s6 = ssub.s32 1, %s4
  %s7 = scalar_select 0, %s6, %s4
  // Predicated region
  $region2: #{transformer_forward.39} parent=0 // pred_check
    _
  $region3: #{transformer_forward.39} parent=0 // pred_check_branch
    %9 = sbr.rel (0) target = $region5
  $region4: #{transformer_forward.39} parent=0 // pred_region
    _
  $region5: #{transformer_forward.39} parent=0 // pred_fallthru
    _
  // Predicated region
  $region6: #{transformer_forward.39} parent=0 // pred_check
    _
  $region7: #{transformer_forward.39} parent=0 // pred_check_branch
    %11 = sbr.rel (0) target = $region9
  $region8: #{transformer_forward.39} parent=0 // pred_region
    _
  $region9: #{transformer_forward.39} parent=0 // pred_fallthru
    _
  // Predicated region
  $region10: #{transformer_forward.39} parent=0 // pred_check
    _
  $region11: #{transformer_forward.39} parent=0 // pred_check_branch
    %13 = sbr.rel (0) target = $region13
  $region12: #{transformer_forward.39} parent=0 // pred_region
    _
  $region13: #{transformer_forward.39} parent=0 // pred_fallthru
    _
  %p15 = scmp.eq.s32.totalorder 0, 0
  // Predicated region
  $region14: #{transformer_forward.39} parent=0 // pred_check
    %p16 = pneg %p15
  $region15: #{transformer_forward.39} parent=0 // pred_check_branch
    %18 = sbr.rel (%p16) target = $region17
  $region16: #{transformer_forward.39} parent=0 // pred_region
    %19 = vst [vmem:[#allocation2] sm:$0xff] 0.0
    %20 = vst [vmem:[#allocation2 + $0x8] sm:$0xff] 0.0
  $region17: #{transformer_forward.39} parent=0 // pred_fallthru
    _
  %v21 = vld [vmem:[#allocation2] sm:$0xff]
  %v22 = vld [vmem:[#allocation2 + $0x8] sm:$0xff]
  %v23 = vld [vmem:[%s0] sm:$0xf]
  %v24 = vld [vmem:[%s0 + $0x4] sm:$0xf]
  %v25 = vld [vmem:[%s1] sm:$0xf]
  %v26 = vld [vmem:[%s1 + $0x4] sm:$0xf]
  %v27 = vld [vmem:[%s1 + $0x8] sm:$0xf]
  %v28 = vld [vmem:[%s1 + $0xc] sm:$0xf]
  %v29 = vld [vmem:[%s1 + $0x10] sm:$0xf]
  %v30 = vld [vmem:[%s1 + $0x14] sm:$0xf]
  %v31 = vld [vmem:[%s1 + $0x18] sm:$0xf]
  %v32 = vld [vmem:[%s1 + $0x1c] sm:$0xf]
  %v33 = vld [vmem:[%s1 + $0x20] sm:$0xf]
  %v34 = vld [vmem:[%s1 + $0x24] sm:$0xf]
  %v35 = vld [vmem:[%s1 + $0x28] sm:$0xf]
  %v36 = vld [vmem:[%s1 + $0x2c] sm:$0xf]
  %v37 = vld [vmem:[%s1 + $0x30] sm:$0xf]
  %v38 = vld [vmem:[%s1 + $0x34] sm:$0xf]
  %v39 = vld [vmem:[%s1 + $0x38] sm:$0xf]
  %v40 = vld [vmem:[%s1 + $0x3c] sm:$0xf]
  %v43 = vunpack.c.l.b16 %v23
  %v44 = vunpack.c.l.b16 %v24
  %v45 = vpack.c.b16 %v44, %v43
  %v63 = vunpack.c.l.b16 %v25
  %v64 = vunpack.c.l.b16 %v26
  %v65 = vunpack.c.l.b16 %v27
  %v66 = vunpack.c.l.b16 %v28
  %v67 = vunpack.c.l.b16 %v29
  %v68 = vunpack.c.l.b16 %v30
  %v69 = vunpack.c.l.b16 %v31
  %v70 = vunpack.c.l.b16 %v32
  %v71 = vunpack.c.l.b16 %v33
  %v72 = vunpack.c.l.b16 %v34
  %v73 = vunpack.c.l.b16 %v35
  %v74 = vunpack.c.l.b16 %v36
  %v75 = vunpack.c.l.b16 %v37
  %v76 = vunpack.c.l.b16 %v38
  %v77 = vunpack.c.l.b16 %v39
  %v78 = vunpack.c.l.b16 %v40
  %v79 = vpack.c.b16 %v64, %v63
  %v80 = vpack.c.b16 %v66, %v65
  %v81 = vpack.c.b16 %v68, %v67
  %v82 = vpack.c.b16 %v70, %v69
  %v83 = vpack.c.b16 %v72, %v71
  %v84 = vpack.c.b16 %v74, %v73
  %v85 = vpack.c.b16 %v76, %v75
  %v86 = vpack.c.b16 %v78, %v77
  %95 = vmatprep.subr.bf16.mxu0 0
  %96 = vmatpush1.bf16.msra.mxu0 %v79
  %97 = vmatprep.subr.bf16.mxu0 0
  %98 = vmatpush1.bf16.msra.mxu0 %v80
  %99 = vmatprep.subr.bf16.mxu0 0
  %100 = vmatpush1.bf16.msra.mxu0 %v81
  %101 = vmatprep.subr.bf16.mxu0 0
  %102 = vmatpush1.bf16.msra.mxu0 %v82
  %103 = vmatprep.subr.bf16.mxu0 0
  %104 = vmatpush1.bf16.msra.mxu0 %v83
  %105 = vmatprep.subr.bf16.mxu0 0
  %106 = vmatpush1.bf16.msra.mxu0 %v84
  %107 = vmatprep.subr.bf16.mxu0 0
  %108 = vmatpush1.bf16.msra.mxu0 %v85
  %109 = vmatprep.subr.bf16.mxu0 0
  %110 = vmatpush1.bf16.msra.mxu0 %v86
  %111 = vmatprep.subr.bf16.mxu0 0
  %112 = vmatpush1.bf16.msra.mxu0 0
  %113 = vmatprep.subr.bf16.mxu0 0
  %114 = vmatpush1.bf16.msra.mxu0 0
  %115 = vmatprep.subr.bf16.mxu0 0
  %116 = vmatpush1.bf16.msra.mxu0 0
  %117 = vmatprep.subr.bf16.mxu0 0
  %118 = vmatpush1.bf16.msra.mxu0 0
  %119 = vmatprep.subr.bf16.mxu0 0
  %120 = vmatpush1.bf16.msra.mxu0 0
  %121 = vmatprep.subr.bf16.mxu0 0
  %122 = vmatpush1.bf16.msra.mxu0 0
  %123 = vmatprep.subr.bf16.mxu0 0
  %124 = vmatpush1.bf16.msra.mxu0 0
  %125 = vmatprep.subr.bf16.mxu0 0
  %126 = vmatpush1.bf16.msra.mxu0 0
  %127 = vmatprep.mubr.bf16.mxu0 0
  %128 = vmatmul.mubr.bf16.gmra.mrb[0].mxu0 %v45
  %v129 = vpop.f32.mrb[0].mxu0
  %v130 = vadd.f32 0.0, %v129
  %v131 = vpop.f32.mrb[0].mxu0
  %v132 = vpop.f32.mrb[0].mxu0
  %v133 = vadd.f32 0.0, %v132
  %v134 = vpop.f32.mrb[0].mxu0
  %135 = vdwg.mxu0
  %v136 = vadd.f32 %v21, %v130
  %v137 = vadd.f32 %v22, %v133
  %138 = vst [vmem:[#allocation2] sm:$0xff] %v136
  %139 = vst [vmem:[#allocation2 + $0x8] sm:$0xff] %v137
  // Predicated region
  $region18: #{transformer_forward.39} parent=0 // pred_check
    %p140 = pneg %p15
  $region19: #{transformer_forward.39} parent=0 // pred_check_branch
    %142 = sbr.rel (%p140) target = $region21
  $region20: #{transformer_forward.39} parent=0 // pred_region
    %v143 = vld [vmem:[#allocation2] sm:$0xff]
    %v144 = vld [vmem:[#allocation2 + $0x8] sm:$0xff]
    %v145 = vld [vmem:[%s2] sm:$0x1]
    %v147 = vlaneseq
    %v148 = vshrl.u32 %v147, 7
    %v149 = vsub.s32 0, %v148
    %v150 = vrot.slane %v145, %v149
    %v152 = vadd.f32 %v143, %v150
    %v153 = vadd.f32 %v144, %v150
    %s154 = smul.u32 0, 128
    %v155 = vlaneseq
    %v156 = vand.u32 %v155, 127
    %v157 = vstv %s154
    %v158 = vadd.s32 %v157, %v156
    %vm159 = vcmp.lt.s32.totalorder %v158, 19
    %v160 = vsel %vm159, %v152, -1e+09
    %v161 = vsel %vm159, %v153, -1e+09
    %162 = vmax.xlane.f32.xlu0 %v160
    %v163 = vpop.xlane.xlu0 %162
    %164 = vmax.xlane.f32.xlu0 %v161
    %v165 = vpop.xlane.xlu0 %164
    %v166 = vsub.f32 %v160, %v163
    %v167 = vsub.f32 %v161, %v165
    %v168 = vmul.f32 %v166, 1.442695
    %v169 = vpow.pop %v168
    %v170 = vmul.f32 %v167, 1.442695
    %v171 = vpow.pop %v170
    %172 = vadd.xlane.f32.xlu0 %v169
    %v173 = vpop.xlane.xlu0 %172
    %174 = vadd.xlane.f32.xlu0 %v171
    %v175 = vpop.xlane.xlu0 %174
    %v176 = vrcp.pop %v173
    %v177 = vmul.f32 %v169, %v176
    %v178 = vrcp.pop %v175
    %v179 = vmul.f32 %v171, %v178
    %180 = vst [vmem:[%s3] sm:$0xff] %v177
    %181 = vst [vmem:[%s3 + $0x8] sm:$0xff] %v179
  $region21: #{transformer_forward.39} parent=0 // pred_fallthru
    _
  // Predicated region
  $region22: #{transformer_forward.39} parent=0 // pred_check
    _
  $region23: #{transformer_forward.39} parent=0 // pred_check_branch
    %183 = sbr.rel (0) target = $region25
  $region24: #{transformer_forward.39} parent=0 // pred_region
    _
  $region25: #{transformer_forward.39} parent=0 // pred_fallthru
    _
  // Predicated region
  $region26: #{transformer_forward.39} parent=0 // pred_check
    _
  $region27: #{transformer_forward.39} parent=0 // pred_check_branch
    %185 = sbr.rel (0) target = $region29
  $region28: #{transformer_forward.39} parent=0 // pred_region
    _
  $region29: #{transformer_forward.39} parent=0 // pred_fallthru
    _

</llo_original>
